<compile_context>
chip_gen: v6e
topology: v6e:2x2x1
jax: 0.10.0
libtpu: 0.0.40
codegen_flags: <defaults>
</compile_context>

<pallas_src>
import functools

import jax
import jax.numpy as jnp
import numpy as np
from jax import lax
from jax.experimental import pallas as pl
from jax.experimental.pallas import tpu as pltpu


def _mha_kernel(q_ref, k_ref, v_ref, wq_ref, wk_ref, wvl_ref, bl_ref, o_ref, *,
                batch: int, seq: int, n_head: int, dim_k: int, dim_out: int):
    """Single grid step: fused projections + all batches/heads + folded out-projection."""
    q = q_ref[...]   # (B*S, D)
    k = k_ref[...]   # (B*S, D)
    v = v_ref[...]   # (B*S, D)

    # Fused lane-dense projections over all B*S rows at once (one wide MXU dot each).
    # 1/sqrt(dk) is pre-folded into wq_ref; W_v @ W_lin^T is pre-folded into wvl_ref.
    qh_all = jnp.dot(q, wq_ref[...], preferred_element_type=jnp.float32)   # (B*S, H*dk)
    kh_all = jnp.dot(k, wk_ref[...], preferred_element_type=jnp.float32)   # (B*S, H*dk)
    vm_all = jnp.dot(v, wvl_ref[...], preferred_element_type=jnp.float32)  # (B*S, H*D), 128-lane dense

    bias = bl_ref[...]                                                     # (1, D)

    for b in range(batch):           # static -> unrolled at trace time
        r0 = b * seq                 # sublane-aligned (seq == 8)
        acc = None
        for h in range(n_head):      # static -> unrolled
            qh = qh_all[r0:r0 + seq, h * dim_k:(h + 1) * dim_k]            # (S, dk)
            kh = kh_all[r0:r0 + seq, h * dim_k:(h + 1) * dim_k]            # (S, dk)
            # Contract last dims directly (no kh.T / XLU transpose).
            s = lax.dot_general(qh, kh, (((1,), (1,)), ((), ())),
                                preferred_element_type=jnp.float32)        # (S, S)
            m = jnp.max(s, axis=-1, keepdims=True)
            e = jnp.exp(s - m)
            p = e / jnp.sum(e, axis=-1, keepdims=True)                     # exact softmax
            vmh = vm_all[r0:r0 + seq, h * dim_out:(h + 1) * dim_out]       # (S, D)
            contrib = jnp.dot(p, vmh, preferred_element_type=jnp.float32)  # (S, D)
            acc = contrib if acc is None else acc + contrib                # v7x: MRB-friendly
        # NOTE: D=32 -> masked 32-lane vst; lane-dense for production D>=128.
        o_ref[r0:r0 + seq, :] = (acc + bias).astype(o_ref.dtype)


def multi_head_attention(q, k, v, W_q, W_k, W_v, W_lin, b_lin):
    """q, k, v: [B, S, D]; W_{q,k,v}: [H, D, dk]; W_lin: [D, H*dv] (torch nn.Linear layout); b_lin: [D]."""
    B, S, D = q.shape
    H, _, dk = W_q.shape
    dv = W_v.shape[2]

    # --- one-time weight prep (amortized; not activation pre-scaling) ---
    scale = np.float32(1.0 / np.sqrt(dk))
    wq_all = (jnp.transpose(W_q, (1, 0, 2)) * scale).reshape(D, H * dk)    # [D, H*dk], scaled
    wk_all = jnp.transpose(W_k, (1, 0, 2)).reshape(D, H * dk)              # [D, H*dk]

    # Fold W_v and W_lin: M_h = W_v[h] @ W_lin[:, h*dv:(h+1)*dv].T  -> (D, D)
    # wvl = [M_0 | M_1 | ... | M_{H-1}] of shape (D, H*D) = (32, 128), fully lane-dense.
    wlin_r = W_lin.reshape(D, H, dv)                                       # [o, h, k]
    wvl = jnp.einsum("hdk,ohk->dho", W_v, wlin_r).reshape(D, H * D)        # [D, H*D]

    bl = b_lin.reshape(1, D)

    # Flatten batch into rows so the projections fuse over B*S rows in one dot each.
    q2 = q.reshape(B * S, D)
    k2 = k.reshape(B * S, D)
    v2 = v.reshape(B * S, D)

    kernel = functools.partial(_mha_kernel, batch=B, seq=S, n_head=H,
                               dim_k=dk, dim_out=D)

    out2 = pl.pallas_call(
        kernel,
        out_shape=jax.ShapeDtypeStruct((B * S, D), q.dtype),
        grid_spec=pltpu.PrefetchScalarGridSpec(
            num_scalar_prefetch=0,
            # Single fat grid step: per-step fixed overhead dominates at these sizes.
            grid=(1,),
            in_specs=[
                pl.BlockSpec((B * S, D), lambda i: (0, 0)),        # q rows
                pl.BlockSpec((B * S, D), lambda i: (0, 0)),        # k rows
                pl.BlockSpec((B * S, D), lambda i: (0, 0)),        # v rows
                pl.BlockSpec((D, H * dk), lambda i: (0, 0)),       # W_q fused (scaled)
                pl.BlockSpec((D, H * dk), lambda i: (0, 0)),       # W_k fused
                pl.BlockSpec((D, H * D), lambda i: (0, 0)),        # W_v @ W_lin^T fold
                pl.BlockSpec((1, D), lambda i: (0, 0)),            # bias
            ],
            out_specs=pl.BlockSpec((B * S, D), lambda i: (0, 0)),
        ),
        compiler_params=pltpu.CompilerParams(
            dimension_semantics=("arbitrary",)),
    )(q2, k2, v2, wq_all, wk_all, wvl, bl)

    return out2.reshape(B, S, D)


def _reference(q, k, v, W_q, W_k, W_v, W_lin, b_lin):
    """Pure-JAX mirror of the PyTorch forward (mask=None)."""
    H, D, dk = W_q.shape
    hi = jax.lax.Precision.HIGHEST
    heads = []
    for h in range(H):
        qh = jnp.matmul(q, W_q[h], precision=hi)
        kh = jnp.matmul(k, W_k[h], precision=hi)
        vh = jnp.matmul(v, W_v[h], precision=hi)
        s = jnp.einsum("bqd,bkd->bqk", qh, kh, precision=hi) / np.sqrt(dk)
        p = jax.nn.softmax(s, axis=2)
        heads.append(jnp.einsum("bqk,bkd->bqd", p, vh, precision=hi))
    attn = jnp.concatenate(heads, axis=2)
    return jnp.matmul(attn, W_lin.T, precision=hi) + b_lin


if __name__ == "__main__":
    # Shapes consistent with the module: dim_inout=32, n_head=4 -> dim_k=dim_v=8
    B, S, D, H = 2, 8, 32, 4
    dk = D // H

    key = jax.random.PRNGKey(0)
    k_q, k_k, k_v, k_wq, k_wk, k_wv, k_wl, k_bl = jax.random.split(key, 8)

    q = jax.random.normal(k_q, (B, S, D), jnp.float32)
    k = jax.random.normal(k_k, (B, S, D), jnp.float32)
    v = jax.random.normal(k_v, (B, S, D), jnp.float32)

    # deterministic parameter init (mimics torch.randn / nn.Linear shapes)
    W_q = jax.random.normal(k_wq, (H, D, dk), jnp.float32)
    W_k = jax.random.normal(k_wk, (H, D, dk), jnp.float32)
    W_v = jax.random.normal(k_wv, (H, D, dk), jnp.float32)
    bound = 1.0 / np.sqrt(H * dk)
    W_lin = jax.random.uniform(k_wl, (D, H * dk), jnp.float32, -bound, bound)
    b_lin = jax.random.uniform(k_bl, (D,), jnp.float32, -bound, bound)

    out = multi_head_attention(q, k, v, W_q, W_k, W_v, W_lin, b_lin)
    out = jax.block_until_ready(out)

    ref = _reference(q, k, v, W_q, W_k, W_v, W_lin, b_lin)
    # Exact softmax restores tight agreement; small slack for the exact W_v.W_lin
    # reassociation and MXU f32 (multi-pass bf16) rounding.
    np.testing.assert_allclose(np.asarray(out), np.asarray(ref), rtol=2e-3, atol=2e-3)

    print("KERNEL_OK")
</pallas_src>

<mosaic_0001>
module attributes {stable_mosaic.version = 11 : i64} {
  func.func @_mha_kernel(%arg0: i32, %arg1: memref<16x32xf32, #tpu.memory_space<vmem>>, %arg2: memref<16x32xf32, #tpu.memory_space<vmem>>, %arg3: memref<16x32xf32, #tpu.memory_space<vmem>>, %arg4: memref<32x32xf32, #tpu.memory_space<vmem>>, %arg5: memref<32x32xf32, #tpu.memory_space<vmem>>, %arg6: memref<32x128xf32, #tpu.memory_space<vmem>>, %arg7: memref<1x32xf32, #tpu.memory_space<vmem>>, %arg8: memref<16x32xf32, #tpu.memory_space<vmem>>) attributes {dimension_semantics = [#tpu.dimension_semantics<arbitrary>], iteration_bounds = array<i64: 1>, scalar_prefetch = 0 : i64, scratch_operands = 0 : i64, tpu.core_type = #tpu.core_type<tc>, window_params = [{pipeline_mode = #tpu.pipeline_mode<synchronous>, transform_indices = @transform_0, window_bounds = array<i64: 16, 32>}, {pipeline_mode = #tpu.pipeline_mode<synchronous>, transform_indices = @transform_1, window_bounds = array<i64: 16, 32>}, {pipeline_mode = #tpu.pipeline_mode<synchronous>, transform_indices = @transform_2, window_bounds = array<i64: 16, 32>}, {pipeline_mode = #tpu.pipeline_mode<synchronous>, transform_indices = @transform_3, window_bounds = array<i64: 32, 32>}, {pipeline_mode = #tpu.pipeline_mode<synchronous>, transform_indices = @transform_4, window_bounds = array<i64: 32, 32>}, {pipeline_mode = #tpu.pipeline_mode<synchronous>, transform_indices = @transform_5, window_bounds = array<i64: 32, 128>}, {pipeline_mode = #tpu.pipeline_mode<synchronous>, transform_indices = @transform_6, window_bounds = array<i64: 1, 32>}, {pipeline_mode = #tpu.pipeline_mode<synchronous>, transform_indices = @transform_7, window_bounds = array<i64: 16, 32>}]} {
    %c0 = arith.constant 0 : index
    %c0_0 = arith.constant 0 : index
    %0 = vector.load %arg1[%c0, %c0_0] : memref<16x32xf32, #tpu.memory_space<vmem>>, vector<16x32xf32>
    %c0_1 = arith.constant 0 : index
    %c0_2 = arith.constant 0 : index
    %1 = vector.load %arg2[%c0_1, %c0_2] : memref<16x32xf32, #tpu.memory_space<vmem>>, vector<16x32xf32>
    %c0_3 = arith.constant 0 : index
    %c0_4 = arith.constant 0 : index
    %2 = vector.load %arg3[%c0_3, %c0_4] : memref<16x32xf32, #tpu.memory_space<vmem>>, vector<16x32xf32>
    %c0_5 = arith.constant 0 : index
    %c0_6 = arith.constant 0 : index
    %3 = vector.load %arg4[%c0_5, %c0_6] : memref<32x32xf32, #tpu.memory_space<vmem>>, vector<32x32xf32>
    %cst = arith.constant dense<0.000000e+00> : vector<16x32xf32>
    %4 = tpu.matmul %0, %3, %cst {dimension_numbers = #tpu.dot_dimension_numbers<[1], [0], [0], [1], [0, 0, 1, 1], [], []>} : vector<16x32xf32>, vector<32x32xf32>, vector<16x32xf32> -> vector<16x32xf32>
    %c0_7 = arith.constant 0 : index
    %c0_8 = arith.constant 0 : index
    %5 = vector.load %arg5[%c0_7, %c0_8] : memref<32x32xf32, #tpu.memory_space<vmem>>, vector<32x32xf32>
    %cst_9 = arith.constant dense<0.000000e+00> : vector<16x32xf32>
    %6 = tpu.matmul %1, %5, %cst_9 {dimension_numbers = #tpu.dot_dimension_numbers<[1], [0], [0], [1], [0, 0, 1, 1], [], []>} : vector<16x32xf32>, vector<32x32xf32>, vector<16x32xf32> -> vector<16x32xf32>
    %c0_10 = arith.constant 0 : index
    %c0_11 = arith.constant 0 : index
    %7 = vector.load %arg6[%c0_10, %c0_11] : memref<32x128xf32, #tpu.memory_space<vmem>>, vector<32x128xf32>
    %cst_12 = arith.constant dense<0.000000e+00> : vector<16x128xf32>
    %8 = tpu.matmul %2, %7, %cst_12 {dimension_numbers = #tpu.dot_dimension_numbers<[1], [0], [0], [1], [0, 0, 1, 1], [], []>} : vector<16x32xf32>, vector<32x128xf32>, vector<16x128xf32> -> vector<16x128xf32>
    %c0_13 = arith.constant 0 : index
    %c0_14 = arith.constant 0 : index
    %9 = vector.load %arg7[%c0_13, %c0_14] : memref<1x32xf32, #tpu.memory_space<vmem>>, vector<1x32xf32>
    %10 = vector.extract_strided_slice %4 {offsets = [0, 0], sizes = [8, 8], strides = [1, 1]} : vector<16x32xf32> to vector<8x8xf32>
    %11 = vector.extract_strided_slice %6 {offsets = [0, 0], sizes = [8, 8], strides = [1, 1]} : vector<16x32xf32> to vector<8x8xf32>
    %cst_15 = arith.constant dense<0.000000e+00> : vector<8x8xf32>
    %12 = tpu.matmul %10, %11, %cst_15 {dimension_numbers = #tpu.dot_dimension_numbers<[1], [1], [0], [0], [0, 0, 1, 0], [], []>} : vector<8x8xf32>, vector<8x8xf32>, vector<8x8xf32> -> vector<8x8xf32>
    %cst_16 = arith.constant dense<0xFF800000> : vector<8xf32>
    %13 = vector.multi_reduction <maximumf>, %12, %cst_16 [1] : vector<8x8xf32> to vector<8xf32>
    %14 = vector.shape_cast %13 : vector<8xf32> to vector<8x1xf32>
    %15 = vector.broadcast %14 : vector<8x1xf32> to vector<8x8xf32>
    %16 = arith.subf %12, %15 : vector<8x8xf32>
    %17 = math.exp %16 : vector<8x8xf32>
    %cst_17 = arith.constant dense<0.000000e+00> : vector<8xf32>
    %18 = vector.multi_reduction <add>, %17, %cst_17 [1] : vector<8x8xf32> to vector<8xf32>
    %19 = vector.shape_cast %18 : vector<8xf32> to vector<8x1xf32>
    %20 = vector.broadcast %19 : vector<8x1xf32> to vector<8x8xf32>
    %21 = arith.divf %17, %20 : vector<8x8xf32>
    %22 = vector.extract_strided_slice %8 {offsets = [0, 0], sizes = [8, 32], strides = [1, 1]} : vector<16x128xf32> to vector<8x32xf32>
    %cst_18 = arith.constant dense<0.000000e+00> : vector<8x32xf32>
    %23 = tpu.matmul %21, %22, %cst_18 {dimension_numbers = #tpu.dot_dimension_numbers<[1], [0], [0], [1], [0, 0, 1, 1], [], []>} : vector<8x8xf32>, vector<8x32xf32>, vector<8x32xf32> -> vector<8x32xf32>
    %24 = vector.extract_strided_slice %4 {offsets = [0, 8], sizes = [8, 8], strides = [1, 1]} : vector<16x32xf32> to vector<8x8xf32>
    %25 = vector.extract_strided_slice %6 {offsets = [0, 8], sizes = [8, 8], strides = [1, 1]} : vector<16x32xf32> to vector<8x8xf32>
    %cst_19 = arith.constant dense<0.000000e+00> : vector<8x8xf32>
    %26 = tpu.matmul %24, %25, %cst_19 {dimension_numbers = #tpu.dot_dimension_numbers<[1], [1], [0], [0], [0, 0, 1, 0], [], []>} : vector<8x8xf32>, vector<8x8xf32>, vector<8x8xf32> -> vector<8x8xf32>
    %cst_20 = arith.constant dense<0xFF800000> : vector<8xf32>
    %27 = vector.multi_reduction <maximumf>, %26, %cst_20 [1] : vector<8x8xf32> to vector<8xf32>
    %28 = vector.shape_cast %27 : vector<8xf32> to vector<8x1xf32>
    %29 = vector.broadcast %28 : vector<8x1xf32> to vector<8x8xf32>
    %30 = arith.subf %26, %29 : vector<8x8xf32>
    %31 = math.exp %30 : vector<8x8xf32>
    %cst_21 = arith.constant dense<0.000000e+00> : vector<8xf32>
    %32 = vector.multi_reduction <add>, %31, %cst_21 [1] : vector<8x8xf32> to vector<8xf32>
    %33 = vector.shape_cast %32 : vector<8xf32> to vector<8x1xf32>
    %34 = vector.broadcast %33 : vector<8x1xf32> to vector<8x8xf32>
    %35 = arith.divf %31, %34 : vector<8x8xf32>
    %36 = vector.extract_strided_slice %8 {offsets = [0, 32], sizes = [8, 32], strides = [1, 1]} : vector<16x128xf32> to vector<8x32xf32>
    %cst_22 = arith.constant dense<0.000000e+00> : vector<8x32xf32>
    %37 = tpu.matmul %35, %36, %cst_22 {dimension_numbers = #tpu.dot_dimension_numbers<[1], [0], [0], [1], [0, 0, 1, 1], [], []>} : vector<8x8xf32>, vector<8x32xf32>, vector<8x32xf32> -> vector<8x32xf32>
    %38 = arith.addf %23, %37 : vector<8x32xf32>
    %39 = vector.extract_strided_slice %4 {offsets = [0, 16], sizes = [8, 8], strides = [1, 1]} : vector<16x32xf32> to vector<8x8xf32>
    %40 = vector.extract_strided_slice %6 {offsets = [0, 16], sizes = [8, 8], strides = [1, 1]} : vector<16x32xf32> to vector<8x8xf32>
    %cst_23 = arith.constant dense<0.000000e+00> : vector<8x8xf32>
    %41 = tpu.matmul %39, %40, %cst_23 {dimension_numbers = #tpu.dot_dimension_numbers<[1], [1], [0], [0], [0, 0, 1, 0], [], []>} : vector<8x8xf32>, vector<8x8xf32>, vector<8x8xf32> -> vector<8x8xf32>
    %cst_24 = arith.constant dense<0xFF800000> : vector<8xf32>
    %42 = vector.multi_reduction <maximumf>, %41, %cst_24 [1] : vector<8x8xf32> to vector<8xf32>
    %43 = vector.shape_cast %42 : vector<8xf32> to vector<8x1xf32>
    %44 = vector.broadcast %43 : vector<8x1xf32> to vector<8x8xf32>
    %45 = arith.subf %41, %44 : vector<8x8xf32>
    %46 = math.exp %45 : vector<8x8xf32>
    %cst_25 = arith.constant dense<0.000000e+00> : vector<8xf32>
    %47 = vector.multi_reduction <add>, %46, %cst_25 [1] : vector<8x8xf32> to vector<8xf32>
    %48 = vector.shape_cast %47 : vector<8xf32> to vector<8x1xf32>
    %49 = vector.broadcast %48 : vector<8x1xf32> to vector<8x8xf32>
    %50 = arith.divf %46, %49 : vector<8x8xf32>
    %51 = vector.extract_strided_slice %8 {offsets = [0, 64], sizes = [8, 32], strides = [1, 1]} : vector<16x128xf32> to vector<8x32xf32>
    %cst_26 = arith.constant dense<0.000000e+00> : vector<8x32xf32>
    %52 = tpu.matmul %50, %51, %cst_26 {dimension_numbers = #tpu.dot_dimension_numbers<[1], [0], [0], [1], [0, 0, 1, 1], [], []>} : vector<8x8xf32>, vector<8x32xf32>, vector<8x32xf32> -> vector<8x32xf32>
    %53 = arith.addf %38, %52 : vector<8x32xf32>
    %54 = vector.extract_strided_slice %4 {offsets = [0, 24], sizes = [8, 8], strides = [1, 1]} : vector<16x32xf32> to vector<8x8xf32>
    %55 = vector.extract_strided_slice %6 {offsets = [0, 24], sizes = [8, 8], strides = [1, 1]} : vector<16x32xf32> to vector<8x8xf32>
    %cst_27 = arith.constant dense<0.000000e+00> : vector<8x8xf32>
    %56 = tpu.matmul %54, %55, %cst_27 {dimension_numbers = #tpu.dot_dimension_numbers<[1], [1], [0], [0], [0, 0, 1, 0], [], []>} : vector<8x8xf32>, vector<8x8xf32>, vector<8x8xf32> -> vector<8x8xf32>
    %cst_28 = arith.constant dense<0xFF800000> : vector<8xf32>
    %57 = vector.multi_reduction <maximumf>, %56, %cst_28 [1] : vector<8x8xf32> to vector<8xf32>
    %58 = vector.shape_cast %57 : vector<8xf32> to vector<8x1xf32>
    %59 = vector.broadcast %58 : vector<8x1xf32> to vector<8x8xf32>
    %60 = arith.subf %56, %59 : vector<8x8xf32>
    %61 = math.exp %60 : vector<8x8xf32>
    %cst_29 = arith.constant dense<0.000000e+00> : vector<8xf32>
    %62 = vector.multi_reduction <add>, %61, %cst_29 [1] : vector<8x8xf32> to vector<8xf32>
    %63 = vector.shape_cast %62 : vector<8xf32> to vector<8x1xf32>
    %64 = vector.broadcast %63 : vector<8x1xf32> to vector<8x8xf32>
    %65 = arith.divf %61, %64 : vector<8x8xf32>
    %66 = vector.extract_strided_slice %8 {offsets = [0, 96], sizes = [8, 32], strides = [1, 1]} : vector<16x128xf32> to vector<8x32xf32>
    %cst_30 = arith.constant dense<0.000000e+00> : vector<8x32xf32>
    %67 = tpu.matmul %65, %66, %cst_30 {dimension_numbers = #tpu.dot_dimension_numbers<[1], [0], [0], [1], [0, 0, 1, 1], [], []>} : vector<8x8xf32>, vector<8x32xf32>, vector<8x32xf32> -> vector<8x32xf32>
    %68 = arith.addf %53, %67 : vector<8x32xf32>
    %69 = vector.broadcast %9 : vector<1x32xf32> to vector<8x32xf32>
    %70 = arith.addf %68, %69 : vector<8x32xf32>
    %c0_31 = arith.constant 0 : index
    %c0_32 = arith.constant 0 : index
    %71 = vector.load %arg8[%c0_31, %c0_32] : memref<16x32xf32, #tpu.memory_space<vmem>>, vector<8x32xf32>
    tpu.vector_store %arg8[%c0_31, %c0_32], %70 {strides = array<i32>} : memref<16x32xf32, #tpu.memory_space<vmem>>, vector<8x32xf32>,
    %72 = vector.extract_strided_slice %4 {offsets = [8, 0], sizes = [8, 8], strides = [1, 1]} : vector<16x32xf32> to vector<8x8xf32>
    %73 = vector.extract_strided_slice %6 {offsets = [8, 0], sizes = [8, 8], strides = [1, 1]} : vector<16x32xf32> to vector<8x8xf32>
    %cst_33 = arith.constant dense<0.000000e+00> : vector<8x8xf32>
    %74 = tpu.matmul %72, %73, %cst_33 {dimension_numbers = #tpu.dot_dimension_numbers<[1], [1], [0], [0], [0, 0, 1, 0], [], []>} : vector<8x8xf32>, vector<8x8xf32>, vector<8x8xf32> -> vector<8x8xf32>
    %cst_34 = arith.constant dense<0xFF800000> : vector<8xf32>
    %75 = vector.multi_reduction <maximumf>, %74, %cst_34 [1] : vector<8x8xf32> to vector<8xf32>
    %76 = vector.shape_cast %75 : vector<8xf32> to vector<8x1xf32>
    %77 = vector.broadcast %76 : vector<8x1xf32> to vector<8x8xf32>
    %78 = arith.subf %74, %77 : vector<8x8xf32>
    %79 = math.exp %78 : vector<8x8xf32>
    %cst_35 = arith.constant dense<0.000000e+00> : vector<8xf32>
    %80 = vector.multi_reduction <add>, %79, %cst_35 [1] : vector<8x8xf32> to vector<8xf32>
    %81 = vector.shape_cast %80 : vector<8xf32> to vector<8x1xf32>
    %82 = vector.broadcast %81 : vector<8x1xf32> to vector<8x8xf32>
    %83 = arith.divf %79, %82 : vector<8x8xf32>
    %84 = vector.extract_strided_slice %8 {offsets = [8, 0], sizes = [8, 32], strides = [1, 1]} : vector<16x128xf32> to vector<8x32xf32>
    %cst_36 = arith.constant dense<0.000000e+00> : vector<8x32xf32>
    %85 = tpu.matmul %83, %84, %cst_36 {dimension_numbers = #tpu.dot_dimension_numbers<[1], [0], [0], [1], [0, 0, 1, 1], [], []>} : vector<8x8xf32>, vector<8x32xf32>, vector<8x32xf32> -> vector<8x32xf32>
    %86 = vector.extract_strided_slice %4 {offsets = [8, 8], sizes = [8, 8], strides = [1, 1]} : vector<16x32xf32> to vector<8x8xf32>
    %87 = vector.extract_strided_slice %6 {offsets = [8, 8], sizes = [8, 8], strides = [1, 1]} : vector<16x32xf32> to vector<8x8xf32>
    %cst_37 = arith.constant dense<0.000000e+00> : vector<8x8xf32>
    %88 = tpu.matmul %86, %87, %cst_37 {dimension_numbers = #tpu.dot_dimension_numbers<[1], [1], [0], [0], [0, 0, 1, 0], [], []>} : vector<8x8xf32>, vector<8x8xf32>, vector<8x8xf32> -> vector<8x8xf32>
    %cst_38 = arith.constant dense<0xFF800000> : vector<8xf32>
    %89 = vector.multi_reduction <maximumf>, %88, %cst_38 [1] : vector<8x8xf32> to vector<8xf32>
    %90 = vector.shape_cast %89 : vector<8xf32> to vector<8x1xf32>
    %91 = vector.broadcast %90 : vector<8x1xf32> to vector<8x8xf32>
    %92 = arith.subf %88, %91 : vector<8x8xf32>
    %93 = math.exp %92 : vector<8x8xf32>
    %cst_39 = arith.constant dense<0.000000e+00> : vector<8xf32>
    %94 = vector.multi_reduction <add>, %93, %cst_39 [1] : vector<8x8xf32> to vector<8xf32>
    %95 = vector.shape_cast %94 : vector<8xf32> to vector<8x1xf32>
    %96 = vector.broadcast %95 : vector<8x1xf32> to vector<8x8xf32>
    %97 = arith.divf %93, %96 : vector<8x8xf32>
    %98 = vector.extract_strided_slice %8 {offsets = [8, 32], sizes = [8, 32], strides = [1, 1]} : vector<16x128xf32> to vector<8x32xf32>
    %cst_40 = arith.constant dense<0.000000e+00> : vector<8x32xf32>
    %99 = tpu.matmul %97, %98, %cst_40 {dimension_numbers = #tpu.dot_dimension_numbers<[1], [0], [0], [1], [0, 0, 1, 1], [], []>} : vector<8x8xf32>, vector<8x32xf32>, vector<8x32xf32> -> vector<8x32xf32>
    %100 = arith.addf %85, %99 : vector<8x32xf32>
    %101 = vector.extract_strided_slice %4 {offsets = [8, 16], sizes = [8, 8], strides = [1, 1]} : vector<16x32xf32> to vector<8x8xf32>
    %102 = vector.extract_strided_slice %6 {offsets = [8, 16], sizes = [8, 8], strides = [1, 1]} : vector<16x32xf32> to vector<8x8xf32>
    %cst_41 = arith.constant dense<0.000000e+00> : vector<8x8xf32>
    %103 = tpu.matmul %101, %102, %cst_41 {dimension_numbers = #tpu.dot_dimension_numbers<[1], [1], [0], [0], [0, 0, 1, 0], [], []>} : vector<8x8xf32>, vector<8x8xf32>, vector<8x8xf32> -> vector<8x8xf32>
    %cst_42 = arith.constant dense<0xFF800000> : vector<8xf32>
    %104 = vector.multi_reduction <maximumf>, %103, %cst_42 [1] : vector<8x8xf32> to vector<8xf32>
    %105 = vector.shape_cast %104 : vector<8xf32> to vector<8x1xf32>
    %106 = vector.broadcast %105 : vector<8x1xf32> to vector<8x8xf32>
    %107 = arith.subf %103, %106 : vector<8x8xf32>
    %108 = math.exp %107 : vector<8x8xf32>
    %cst_43 = arith.constant dense<0.000000e+00> : vector<8xf32>
    %109 = vector.multi_reduction <add>, %108, %cst_43 [1] : vector<8x8xf32> to vector<8xf32>
    %110 = vector.shape_cast %109 : vector<8xf32> to vector<8x1xf32>
    %111 = vector.broadcast %110 : vector<8x1xf32> to vector<8x8xf32>
    %112 = arith.divf %108, %111 : vector<8x8xf32>
    %113 = vector.extract_strided_slice %8 {offsets = [8, 64], sizes = [8, 32], strides = [1, 1]} : vector<16x128xf32> to vector<8x32xf32>
    %cst_44 = arith.constant dense<0.000000e+00> : vector<8x32xf32>
    %114 = tpu.matmul %112, %113, %cst_44 {dimension_numbers = #tpu.dot_dimension_numbers<[1], [0], [0], [1], [0, 0, 1, 1], [], []>} : vector<8x8xf32>, vector<8x32xf32>, vector<8x32xf32> -> vector<8x32xf32>
    %115 = arith.addf %100, %114 : vector<8x32xf32>
    %116 = vector.extract_strided_slice %4 {offsets = [8, 24], sizes = [8, 8], strides = [1, 1]} : vector<16x32xf32> to vector<8x8xf32>
    %117 = vector.extract_strided_slice %6 {offsets = [8, 24], sizes = [8, 8], strides = [1, 1]} : vector<16x32xf32> to vector<8x8xf32>
    %cst_45 = arith.constant dense<0.000000e+00> : vector<8x8xf32>
    %118 = tpu.matmul %116, %117, %cst_45 {dimension_numbers = #tpu.dot_dimension_numbers<[1], [1], [0], [0], [0, 0, 1, 0], [], []>} : vector<8x8xf32>, vector<8x8xf32>, vector<8x8xf32> -> vector<8x8xf32>
    %cst_46 = arith.constant dense<0xFF800000> : vector<8xf32>
    %119 = vector.multi_reduction <maximumf>, %118, %cst_46 [1] : vector<8x8xf32> to vector<8xf32>
    %120 = vector.shape_cast %119 : vector<8xf32> to vector<8x1xf32>
    %121 = vector.broadcast %120 : vector<8x1xf32> to vector<8x8xf32>
    %122 = arith.subf %118, %121 : vector<8x8xf32>
    %123 = math.exp %122 : vector<8x8xf32>
    %cst_47 = arith.constant dense<0.000000e+00> : vector<8xf32>
    %124 = vector.multi_reduction <add>, %123, %cst_47 [1] : vector<8x8xf32> to vector<8xf32>
    %125 = vector.shape_cast %124 : vector<8xf32> to vector<8x1xf32>
    %126 = vector.broadcast %125 : vector<8x1xf32> to vector<8x8xf32>
    %127 = arith.divf %123, %126 : vector<8x8xf32>
    %128 = vector.extract_strided_slice %8 {offsets = [8, 96], sizes = [8, 32], strides = [1, 1]} : vector<16x128xf32> to vector<8x32xf32>
    %cst_48 = arith.constant dense<0.000000e+00> : vector<8x32xf32>
    %129 = tpu.matmul %127, %128, %cst_48 {dimension_numbers = #tpu.dot_dimension_numbers<[1], [0], [0], [1], [0, 0, 1, 1], [], []>} : vector<8x8xf32>, vector<8x32xf32>, vector<8x32xf32> -> vector<8x32xf32>
    %130 = arith.addf %115, %129 : vector<8x32xf32>
    %131 = vector.broadcast %9 : vector<1x32xf32> to vector<8x32xf32>
    %132 = arith.addf %130, %131 : vector<8x32xf32>
    %c8 = arith.constant 8 : index
    %c0_49 = arith.constant 0 : index
    %133 = vector.load %arg8[%c8, %c0_49] : memref<16x32xf32, #tpu.memory_space<vmem>>, vector<8x32xf32>
    tpu.vector_store %arg8[%c8, %c0_49], %132 {strides = array<i32>} : memref<16x32xf32, #tpu.memory_space<vmem>>, vector<8x32xf32>,
    return
  }
  func.func @transform_0(%arg0: i32) -> (i32, i32) {
    %c0_i32 = arith.constant 0 : i32
    %c0_i32_0 = arith.constant 0 : i32
    %c0_i32_1 = arith.constant 0 : i32
    return %c0_i32, %c0_i32_0 : i32, i32
  }
  func.func @transform_1(%arg0: i32) -> (i32, i32) {
    %c0_i32 = arith.constant 0 : i32
    %c0_i32_0 = arith.constant 0 : i32
    %c0_i32_1 = arith.constant 0 : i32
    return %c0_i32, %c0_i32_0 : i32, i32
  }
  func.func @transform_2(%arg0: i32) -> (i32, i32) {
    %c0_i32 = arith.constant 0 : i32
    %c0_i32_0 = arith.constant 0 : i32
    %c0_i32_1 = arith.constant 0 : i32
    return %c0_i32, %c0_i32_0 : i32, i32
  }
  func.func @transform_3(%arg0: i32) -> (i32, i32) {
    %c0_i32 = arith.constant 0 : i32
    %c0_i32_0 = arith.constant 0 : i32
    %c0_i32_1 = arith.constant 0 : i32
    return %c0_i32, %c0_i32_0 : i32, i32
  }
  func.func @transform_4(%arg0: i32) -> (i32, i32) {
    %c0_i32 = arith.constant 0 : i32
    %c0_i32_0 = arith.constant 0 : i32
    %c0_i32_1 = arith.constant 0 : i32
    return %c0_i32, %c0_i32_0 : i32, i32
  }
  func.func @transform_5(%arg0: i32) -> (i32, i32) {
    %c0_i32 = arith.constant 0 : i32
    %c0_i32_0 = arith.constant 0 : i32
    %c0_i32_1 = arith.constant 0 : i32
    return %c0_i32, %c0_i32_0 : i32, i32
  }
  func.func @transform_6(%arg0: i32) -> (i32, i32) {
    %c0_i32 = arith.constant 0 : i32
    %c0_i32_0 = arith.constant 0 : i32
    %c0_i32_1 = arith.constant 0 : i32
    return %c0_i32, %c0_i32_0 : i32, i32
  }
  func.func @transform_7(%arg0: i32) -> (i32, i32) {
    %c0_i32 = arith.constant 0 : i32
    %c0_i32_0 = arith.constant 0 : i32
    %c0_i32_1 = arith.constant 0 : i32
    return %c0_i32, %c0_i32_0 : i32, i32
  }
}

</mosaic_0001>

<llo_original>
// kernel: tpu_custom_call.1
$region0: #{tpu_custom_call.1}
  #allocation0 [shape = 'u32[]', space=smem, size = 0x4, offset = 0x4, fixed_abs, tag = 'smem constant byte address 0x4 - core index']
  #allocation1 [shape = 'u32[144,128]{1,0:T(1,128)}', space=vmem, size = 0x12000, scoped, tag = 'internal scratch']
  %s0 = inlined_call_operand.hbm [shape: f32[16,32], index: 0, kind: input, shape index: {}]
  %s1 = inlined_call_operand.hbm [shape: f32[16,32], index: 1, kind: input, shape index: {}]
  %s2 = inlined_call_operand.hbm [shape: f32[16,32], index: 2, kind: input, shape index: {}]
  %s3 = inlined_call_operand.hbm [shape: f32[32,32], index: 3, kind: input, shape index: {}]
  %s4 = inlined_call_operand.hbm [shape: f32[32,32], index: 4, kind: input, shape index: {}]
  %s5 = inlined_call_operand.hbm [shape: f32[32,128], index: 5, kind: input, shape index: {}]
  %s6 = inlined_call_operand.vmem [shape: f32[1,32], index: 6, kind: input, shape index: {}]
  %s7 = inlined_call_operand.hbm [shape: f32[16,32], index: 7, kind: output, shape index: {}]
  %s8 = sld [smem:[#allocation0]]
  $region62: #{tpu_custom_call.1} parent=0
    _
  %s10 = ssub.s32 1, %s8
  %s11 = scalar_select 0, %s10, %s8
  $region1: #{tpu_custom_call.1} parent=0
    #allocation2 [shape = 'u8[8192]{0}', space=vmem, size = 0x2000, scoped, tag = 'input window, operand 0, single buffered']
    #allocation3 [shape = 's32[1]{0}', space=sflag, size = 0x4, scoped, tag = 'scoped memory for tpu_custom_call.1']
    #allocation4 [shape = 's32[1]{0}', space=sflag, size = 0x4, scoped, tag = 'scoped memory for tpu_custom_call.1']
    #allocation5 [shape = 'u8[8192]{0}', space=vmem, size = 0x2000, scoped, tag = 'input window, operand 1, single buffered']
    #allocation6 [shape = 's32[1]{0}', space=sflag, size = 0x4, scoped, tag = 'scoped memory for tpu_custom_call.1']
    #allocation7 [shape = 'u8[8192]{0}', space=vmem, size = 0x2000, scoped, tag = 'input window, operand 2, single buffered']
    #allocation8 [shape = 'u8[16384]{0}', space=vmem, size = 0x4000, scoped, tag = 'input window, operand 3, single buffered']
    #allocation9 [shape = 's32[1]{0}', space=sflag, size = 0x4, scoped, tag = 'scoped memory for tpu_custom_call.1']
    #allocation10 [shape = 'u8[16384]{0}', space=vmem, size = 0x4000, scoped, tag = 'input window, operand 4, single buffered']
    #allocation11 [shape = 'u8[16384]{0}', space=vmem, size = 0x4000, scoped, tag = 'input window, operand 5, single buffered']
    #allocation12 [shape = 's32[1]{0}', space=sflag, size = 0x4, scoped, tag = 'scoped memory for tpu_custom_call.1']
    #allocation13 [shape = 'u8[8192]{0}', space=vmem, size = 0x2000, scoped, tag = 'output window, operand 0, single buffered']
    %12 = vsyncpa [#allocation3], 0
    %13 = vsyncpa [#allocation6], 0
    %14 = vsyncpa [#allocation9], 0
    %15 = vsyncpa [#allocation12], 0
    %16 = vsyncpa [#allocation4], 0
    // Predicated region
    $region2: #{tpu_custom_call.1} parent=1 // pred_check
      _
    $region3: #{tpu_custom_call.1} parent=1 // pred_check_branch
      %18 = sbr.rel (0) target = $region5
    $region4: #{tpu_custom_call.1} parent=1 // pred_region
      %s20 = ssub.s32 256, 256
      %21 = vsyncadd [#allocation3], %s20
      %s22 = sshll.u32 [#allocation2], 4
      %s23 = int_to_ptr.vmem [resolvable:$true] %s22
      %28 = dma.hbm_to_vmem [thread:$0]  %s0, 256, %s23, [#allocation3], 128, 128, 8
    $region5: #{tpu_custom_call.1} parent=1 // pred_fallthru
      _
    // Predicated region
    $region6: #{tpu_custom_call.1} parent=1 // pred_check
      _
    $region7: #{tpu_custom_call.1} parent=1 // pred_check_branch
      %30 = sbr.rel (0) target = $region9
    $region8: #{tpu_custom_call.1} parent=1 // pred_region
      %s32 = ssub.s32 256, 256
      %33 = vsyncadd [#allocation6], %s32
      %s34 = sshll.u32 [#allocation5], 4
      %s35 = int_to_ptr.vmem [resolvable:$true] %s34
      %40 = dma.hbm_to_vmem [thread:$0]  %s1, 256, %s35, [#allocation6], 128, 128, 8
    $region9: #{tpu_custom_call.1} parent=1 // pred_fallthru
      _
    // Predicated region
    $region10: #{tpu_custom_call.1} parent=1 // pred_check
      _
    $region11: #{tpu_custom_call.1} parent=1 // pred_check_branch
      %42 = sbr.rel (0) target = $region13
    $region12: #{tpu_custom_call.1} parent=1 // pred_region
      %s44 = ssub.s32 256, 256
      %45 = vsyncadd [#allocation6], %s44
      %s46 = sshll.u32 [#allocation7], 4
      %s47 = int_to_ptr.vmem [resolvable:$true] %s46
      %52 = dma.hbm_to_vmem [thread:$0]  %s2, 256, %s47, [#allocation6], 128, 128, 8
    $region13: #{tpu_custom_call.1} parent=1 // pred_fallthru
      _
    // Predicated region
    $region14: #{tpu_custom_call.1} parent=1 // pred_check
      _
    $region15: #{tpu_custom_call.1} parent=1 // pred_check_branch
      %54 = sbr.rel (0) target = $region17
    $region16: #{tpu_custom_call.1} parent=1 // pred_region
      %s56 = ssub.s32 512, 512
      %57 = vsyncadd [#allocation9], %s56
      %s58 = sshll.u32 [#allocation8], 4
      %s59 = int_to_ptr.vmem [resolvable:$true] %s58
      %64 = dma.hbm_to_vmem [thread:$0]  %s3, 512, %s59, [#allocation9], 128, 128, 8
    $region17: #{tpu_custom_call.1} parent=1 // pred_fallthru
      _
    // Predicated region
    $region18: #{tpu_custom_call.1} parent=1 // pred_check
      _
    $region19: #{tpu_custom_call.1} parent=1 // pred_check_branch
      %66 = sbr.rel (0) target = $region21
    $region20: #{tpu_custom_call.1} parent=1 // pred_region
      %s68 = ssub.s32 512, 512
      %69 = vsyncadd [#allocation9], %s68
      %s70 = sshll.u32 [#allocation10], 4
      %s71 = int_to_ptr.vmem [resolvable:$true] %s70
      %76 = dma.hbm_to_vmem [thread:$0]  %s4, 512, %s71, [#allocation9], 128, 128, 8
    $region21: #{tpu_custom_call.1} parent=1 // pred_fallthru
      _
    // Predicated region
    $region22: #{tpu_custom_call.1} parent=1 // pred_check
      _
    $region23: #{tpu_custom_call.1} parent=1 // pred_check_branch
      %78 = sbr.rel (0) target = $region25
    $region24: #{tpu_custom_call.1} parent=1 // pred_region
      %s80 = ssub.s32 512, 512
      %81 = vsyncadd [#allocation12], %s80
      %s82 = sshll.u32 [#allocation11], 4
      %s83 = int_to_ptr.vmem [resolvable:$true] %s82
      %88 = dma.hbm_to_vmem [thread:$0]  %s5, 512, %s83, [#allocation12], 128, 128, 8
    $region25: #{tpu_custom_call.1} parent=1 // pred_fallthru
      _
    // Predicated region
    $region26: #{tpu_custom_call.1} parent=1 // pred_check
      _
    $region27: #{tpu_custom_call.1} parent=1 // pred_check_branch
      %90 = sbr.rel (0) target = $region29
    $region28: #{tpu_custom_call.1} parent=1 // pred_region
      _
    $region29: #{tpu_custom_call.1} parent=1 // pred_fallthru
      _
    // Predicated region
    $region30: #{tpu_custom_call.1} parent=1 // pred_check
      _
    $region31: #{tpu_custom_call.1} parent=1 // pred_check_branch
      %92 = sbr.rel (0) target = $region33
    $region32: #{tpu_custom_call.1} parent=1 // pred_region
      %93 = dma.done [#allocation3], 256
    $region33: #{tpu_custom_call.1} parent=1 // pred_fallthru
      _
    // Predicated region
    $region34: #{tpu_custom_call.1} parent=1 // pred_check
      _
    $region35: #{tpu_custom_call.1} parent=1 // pred_check_branch
      %95 = sbr.rel (0) target = $region37
    $region36: #{tpu_custom_call.1} parent=1 // pred_region
      %96 = dma.done [#allocation6], 256
    $region37: #{tpu_custom_call.1} parent=1 // pred_fallthru
      _
    // Predicated region
    $region38: #{tpu_custom_call.1} parent=1 // pred_check
      _
    $region39: #{tpu_custom_call.1} parent=1 // pred_check_branch
      %98 = sbr.rel (0) target = $region41
    $region40: #{tpu_custom_call.1} parent=1 // pred_region
      %99 = dma.done [#allocation6], 256
    $region41: #{tpu_custom_call.1} parent=1 // pred_fallthru
      _
    // Predicated region
    $region42: #{tpu_custom_call.1} parent=1 // pred_check
      _
    $region43: #{tpu_custom_call.1} parent=1 // pred_check_branch
      %101 = sbr.rel (0) target = $region45
    $region44: #{tpu_custom_call.1} parent=1 // pred_region
      %102 = dma.done [#allocation9], 512
    $region45: #{tpu_custom_call.1} parent=1 // pred_fallthru
      _
    // Predicated region
    $region46: #{tpu_custom_call.1} parent=1 // pred_check
      _
    $region47: #{tpu_custom_call.1} parent=1 // pred_check_branch
      %104 = sbr.rel (0) target = $region49
    $region48: #{tpu_custom_call.1} parent=1 // pred_region
      %105 = dma.done [#allocation9], 512
    $region49: #{tpu_custom_call.1} parent=1 // pred_fallthru
      _
    // Predicated region
    $region50: #{tpu_custom_call.1} parent=1 // pred_check
      _
    $region51: #{tpu_custom_call.1} parent=1 // pred_check_branch
      %107 = sbr.rel (0) target = $region53
    $region52: #{tpu_custom_call.1} parent=1 // pred_region
      %108 = dma.done [#allocation12], 512
    $region53: #{tpu_custom_call.1} parent=1 // pred_fallthru
      _
    %v109 = vld [vmem:[#allocation2] sm:$0xff]
    %v110 = vld [vmem:[#allocation2 + $0x8] sm:$0xff]
    %v111 = vld [vmem:[#allocation5] sm:$0xff]
    %v112 = vld [vmem:[#allocation5 + $0x8] sm:$0xff]
    %v113 = vld [vmem:[#allocation7] sm:$0xff]
    %v114 = vld [vmem:[#allocation7 + $0x8] sm:$0xff]
    %v115 = vld [vmem:[#allocation8] sm:$0xff]
    %v116 = vld [vmem:[#allocation8 + $0x8] sm:$0xff]
    %v117 = vld [vmem:[#allocation8 + $0x10] sm:$0xff]
    %v118 = vld [vmem:[#allocation8 + $0x18] sm:$0xff]
    %vm119 = vcmask 261120
    %v121 = vsel %vm119, %v109, 0
    %v124 = vsel %vm119, %v110, 0
    %126 = vmatprep.subr.mxu0 0.0
    %127 = vmatpush1.msra.mxu0 0.0
    %128 = vmatprep.subr.mxu0 0.0
    %129 = vmatpush1.msra.mxu0 0.0
    %130 = vmatprep.subr.mxu0 0.0
    %131 = vmatpush1.msra.mxu0 0.0
    %132 = vmatprep.subr.mxu0 0.0
    %133 = vmatpush1.msra.mxu0 0.0
    %134 = vmatprep.subr.mxu0 0.0
    %135 = vmatpush1.msra.mxu0 0.0
    %136 = vmatprep.subr.mxu0 0.0
    %137 = vmatpush1.msra.mxu0 0.0
    %138 = vmatprep.subr.mxu0 0.0
    %139 = vmatpush1.msra.mxu0 0.0
    %140 = vmatprep.subr.mxu0 0.0
    %141 = vmatpush1.msra.mxu0 0.0
    %142 = vmatprep.subr.mxu0 0.0
    %143 = vmatpush1.msra.mxu0 0.0
    %144 = vmatprep.subr.mxu0 0.0
    %145 = vmatpush1.msra.mxu0 0.0
    %146 = vmatprep.subr.mxu0 0.0
    %147 = vmatpush1.msra.mxu0 0.0
    %148 = vmatprep.subr.mxu0 0.0
    %149 = vmatpush1.msra.mxu0 0.0
    %150 = vmatprep.subr.mxu0 0.0
    %151 = vmatpush1.msra.mxu0 %v118
    %152 = vmatprep.subr.mxu0 0.0
    %153 = vmatpush1.msra.mxu0 %v117
    %154 = vmatprep.subr.mxu0 0.0
    %155 = vmatpush1.msra.mxu0 %v116
    %156 = vmatprep.subr.mxu0 0.0
    %157 = vmatpush1.msra.mxu0 %v115
    %158 = vmatprep.subr.mxu0 0.0
    %159 = vmatpush2.msra.mxu0 0.0
    %160 = vmatprep.subr.mxu0 0.0
    %161 = vmatpush2.msra.mxu0 0.0
    %162 = vmatprep.subr.mxu0 0.0
    %163 = vmatpush2.msra.mxu0 0.0
    %164 = vmatprep.subr.mxu0 0.0
    %165 = vmatpush2.msra.mxu0 0.0
    %166 = vmatprep.subr.mxu0 0.0
    %167 = vmatpush2.msra.mxu0 0.0
    %168 = vmatprep.subr.mxu0 0.0
    %169 = vmatpush2.msra.mxu0 0.0
    %170 = vmatprep.subr.mxu0 0.0
    %171 = vmatpush2.msra.mxu0 0.0
    %172 = vmatprep.subr.mxu0 0.0
    %173 = vmatpush2.msra.mxu0 0.0
    %174 = vmatprep.subr.mxu0 0.0
    %175 = vmatpush2.msra.mxu0 0.0
    %176 = vmatprep.subr.mxu0 0.0
    %177 = vmatpush2.msra.mxu0 0.0
    %178 = vmatprep.subr.mxu0 0.0
    %179 = vmatpush2.msra.mxu0 0.0
    %180 = vmatprep.subr.mxu0 0.0
    %181 = vmatpush2.msra.mxu0 0.0
    %182 = vmatprep.subr.mxu0 0.0
    %183 = vmatpush2.msra.mxu0 0.0
    %184 = vmatprep.subr.mxu0 0.0
    %185 = vmatpush2.msra.mxu0 0.0
    %186 = vmatprep.subr.mxu0 0.0
    %187 = vmatpush2.msra.mxu0 0.0
    %188 = vmatprep.subr.mxu0 0.0
    %189 = vmatpush2.msra.mxu0 0.0
    %190 = vmatprep.mubr.f32.mxu0 0.0
    %191 = vmatmul.mubr.f32.gmra.mxu0 %v121
    %v192 = vpop.f32.mrf.mxu0
    %v193 = vadd.f32 0.0, %v192
    %v194 = vpop.f32.mrf.mxu0
    %195 = vmatprep.mubr.f32.mxu0 0.0
    %196 = vmatmul.mubr.f32.gmra.mxu0 %v124
    %v197 = vpop.f32.mrf.mxu0
    %v198 = vadd.f32 0.0, %v197
    %v199 = vpop.f32.mrf.mxu0
    %200 = vdwg.mxu0
    %v201 = vld [vmem:[#allocation10] sm:$0xff]
    %v202 = vld [vmem:[#allocation10 + $0x8] sm:$0xff]
    %v203 = vld [vmem:[#allocation10 + $0x10] sm:$0xff]
    %v204 = vld [vmem:[#allocation10 + $0x18] sm:$0xff]
    %v206 = vsel %vm119, %v111, 0
    %v209 = vsel %vm119, %v112, 0
    %211 = vmatprep.subr.mxu0 0.0
    %212 = vmatpush1.msra.mxu0 0.0
    %213 = vmatprep.subr.mxu0 0.0
    %214 = vmatpush1.msra.mxu0 0.0
    %215 = vmatprep.subr.mxu0 0.0
    %216 = vmatpush1.msra.mxu0 0.0
    %217 = vmatprep.subr.mxu0 0.0
    %218 = vmatpush1.msra.mxu0 0.0
    %219 = vmatprep.subr.mxu0 0.0
    %220 = vmatpush1.msra.mxu0 0.0
    %221 = vmatprep.subr.mxu0 0.0
    %222 = vmatpush1.msra.mxu0 0.0
    %223 = vmatprep.subr.mxu0 0.0
    %224 = vmatpush1.msra.mxu0 0.0
    %225 = vmatprep.subr.mxu0 0.0
    %226 = vmatpush1.msra.mxu0 0.0
    %227 = vmatprep.subr.mxu0 0.0
    %228 = vmatpush1.msra.mxu0 0.0
    %229 = vmatprep.subr.mxu0 0.0
    %230 = vmatpush1.msra.mxu0 0.0
    %231 = vmatprep.subr.mxu0 0.0
    %232 = vmatpush1.msra.mxu0 0.0
    %233 = vmatprep.subr.mxu0 0.0
    %234 = vmatpush1.msra.mxu0 0.0
    %235 = vmatprep.subr.mxu0 0.0
    %236 = vmatpush1.msra.mxu0 %v204
    %237 = vmatprep.subr.mxu0 0.0
    %238 = vmatpush1.msra.mxu0 %v203
    %239 = vmatprep.subr.mxu0 0.0
    %240 = vmatpush1.msra.mxu0 %v202
    %241 = vmatprep.subr.mxu0 0.0
    %242 = vmatpush1.msra.mxu0 %v201
    %243 = vmatprep.subr.mxu0 0.0
    %244 = vmatpush2.msra.mxu0 0.0
    %245 = vmatprep.subr.mxu0 0.0
    %246 = vmatpush2.msra.mxu0 0.0
    %247 = vmatprep.subr.mxu0 0.0
    %248 = vmatpush2.msra.mxu0 0.0
    %249 = vmatprep.subr.mxu0 0.0
    %250 = vmatpush2.msra.mxu0 0.0
    %251 = vmatprep.subr.mxu0 0.0
    %252 = vmatpush2.msra.mxu0 0.0
    %253 = vmatprep.subr.mxu0 0.0
    %254 = vmatpush2.msra.mxu0 0.0
    %255 = vmatprep.subr.mxu0 0.0
    %256 = vmatpush2.msra.mxu0 0.0
    %257 = vmatprep.subr.mxu0 0.0
    %258 = vmatpush2.msra.mxu0 0.0
    %259 = vmatprep.subr.mxu0 0.0
    %260 = vmatpush2.msra.mxu0 0.0
    %261 = vmatprep.subr.mxu0 0.0
    %262 = vmatpush2.msra.mxu0 0.0
    %263 = vmatprep.subr.mxu0 0.0
    %264 = vmatpush2.msra.mxu0 0.0
    %265 = vmatprep.subr.mxu0 0.0
    %266 = vmatpush2.msra.mxu0 0.0
    %267 = vmatprep.subr.mxu0 0.0
    %268 = vmatpush2.msra.mxu0 0.0
    %269 = vmatprep.subr.mxu0 0.0
    %270 = vmatpush2.msra.mxu0 0.0
    %271 = vmatprep.subr.mxu0 0.0
    %272 = vmatpush2.msra.mxu0 0.0
    %273 = vmatprep.subr.mxu0 0.0
    %274 = vmatpush2.msra.mxu0 0.0
    %275 = vmatprep.mubr.f32.mxu0 0.0
    %276 = vmatmul.mubr.f32.gmra.mxu0 %v206
    %v277 = vpop.f32.mrf.mxu0
    %v278 = vadd.f32 0.0, %v277
    %v279 = vpop.f32.mrf.mxu0
    %280 = vmatprep.mubr.f32.mxu0 0.0
    %281 = vmatmul.mubr.f32.gmra.mxu0 %v209
    %v282 = vpop.f32.mrf.mxu0
    %v283 = vadd.f32 0.0, %v282
    %v284 = vpop.f32.mrf.mxu0
    %285 = vdwg.mxu0
    %v286 = vld [vmem:[#allocation11] sm:$0xff]
    %v287 = vld [vmem:[#allocation11 + $0x8] sm:$0xff]
    %v288 = vld [vmem:[#allocation11 + $0x10] sm:$0xff]
    %v289 = vld [vmem:[#allocation11 + $0x18] sm:$0xff]
    %v291 = vsel %vm119, %v113, 0
    %v294 = vsel %vm119, %v114, 0
    %296 = vmatprep.subr.mxu0 0.0
    %297 = vmatpush1.msra.mxu0 0.0
    %298 = vmatprep.subr.mxu0 0.0
    %299 = vmatpush1.msra.mxu0 0.0
    %300 = vmatprep.subr.mxu0 0.0
    %301 = vmatpush1.msra.mxu0 0.0
    %302 = vmatprep.subr.mxu0 0.0
    %303 = vmatpush1.msra.mxu0 0.0
    %304 = vmatprep.subr.mxu0 0.0
    %305 = vmatpush1.msra.mxu0 0.0
    %306 = vmatprep.subr.mxu0 0.0
    %307 = vmatpush1.msra.mxu0 0.0
    %308 = vmatprep.subr.mxu0 0.0
    %309 = vmatpush1.msra.mxu0 0.0
    %310 = vmatprep.subr.mxu0 0.0
    %311 = vmatpush1.msra.mxu0 0.0
    %312 = vmatprep.subr.mxu0 0.0
    %313 = vmatpush1.msra.mxu0 0.0
    %314 = vmatprep.subr.mxu0 0.0
    %315 = vmatpush1.msra.mxu0 0.0
    %316 = vmatprep.subr.mxu0 0.0
    %317 = vmatpush1.msra.mxu0 0.0
    %318 = vmatprep.subr.mxu0 0.0
    %319 = vmatpush1.msra.mxu0 0.0
    %320 = vmatprep.subr.mxu0 0.0
    %321 = vmatpush1.msra.mxu0 %v289
    %322 = vmatprep.subr.mxu0 0.0
    %323 = vmatpush1.msra.mxu0 %v288
    %324 = vmatprep.subr.mxu0 0.0
    %325 = vmatpush1.msra.mxu0 %v287
    %326 = vmatprep.subr.mxu0 0.0
    %327 = vmatpush1.msra.mxu0 %v286
    %328 = vmatprep.subr.mxu0 0.0
    %329 = vmatpush2.msra.mxu0 0.0
    %330 = vmatprep.subr.mxu0 0.0
    %331 = vmatpush2.msra.mxu0 0.0
    %332 = vmatprep.subr.mxu0 0.0
    %333 = vmatpush2.msra.mxu0 0.0
    %334 = vmatprep.subr.mxu0 0.0
    %335 = vmatpush2.msra.mxu0 0.0
    %336 = vmatprep.subr.mxu0 0.0
    %337 = vmatpush2.msra.mxu0 0.0
    %338 = vmatprep.subr.mxu0 0.0
    %339 = vmatpush2.msra.mxu0 0.0
    %340 = vmatprep.subr.mxu0 0.0
    %341 = vmatpush2.msra.mxu0 0.0
    %342 = vmatprep.subr.mxu0 0.0
    %343 = vmatpush2.msra.mxu0 0.0
    %344 = vmatprep.subr.mxu0 0.0
    %345 = vmatpush2.msra.mxu0 0.0
    %346 = vmatprep.subr.mxu0 0.0
    %347 = vmatpush2.msra.mxu0 0.0
    %348 = vmatprep.subr.mxu0 0.0
    %349 = vmatpush2.msra.mxu0 0.0
    %350 = vmatprep.subr.mxu0 0.0
    %351 = vmatpush2.msra.mxu0 0.0
    %352 = vmatprep.subr.mxu0 0.0
    %353 = vmatpush2.msra.mxu0 0.0
    %354 = vmatprep.subr.mxu0 0.0
    %355 = vmatpush2.msra.mxu0 0.0
    %356 = vmatprep.subr.mxu0 0.0
    %357 = vmatpush2.msra.mxu0 0.0
    %358 = vmatprep.subr.mxu0 0.0
    %359 = vmatpush2.msra.mxu0 0.0
    %360 = vmatprep.mubr.f32.mxu0 0.0
    %361 = vmatmul.mubr.f32.gmra.mxu0 %v291
    %v362 = vpop.f32.mrf.mxu0
    %v363 = vadd.f32 0.0, %v362
    %v364 = vpop.f32.mrf.mxu0
    %365 = vmatprep.mubr.f32.mxu0 0.0
    %366 = vmatmul.mubr.f32.gmra.mxu0 %v294
    %v367 = vpop.f32.mrf.mxu0
    %v368 = vadd.f32 0.0, %v367
    %v369 = vpop.f32.mrf.mxu0
    %370 = vdwg.mxu0
    %v371 = vld [vmem:[%s6] sm:$0x1]
    %vm372 = vcmask 64512
    %v374 = vsel %vm372, %v193, 0
    %v377 = vsel %vm372, %v278, 0
    %379 = vmatprep.subr.mxu0 0.0
    %380 = vmatpush1.xpose.msra.mxu0 0.0
    %381 = vmatprep.subr.mxu0 0.0
    %382 = vmatpush1.xpose.msra.mxu0 0.0
    %383 = vmatprep.subr.mxu0 0.0
    %384 = vmatpush1.xpose.msra.mxu0 0.0
    %385 = vmatprep.subr.mxu0 0.0
    %386 = vmatpush1.xpose.msra.mxu0 0.0
    %387 = vmatprep.subr.mxu0 0.0
    %388 = vmatpush1.xpose.msra.mxu0 0.0
    %389 = vmatprep.subr.mxu0 0.0
    %390 = vmatpush1.xpose.msra.mxu0 0.0
    %391 = vmatprep.subr.mxu0 0.0
    %392 = vmatpush1.xpose.msra.mxu0 0.0
    %393 = vmatprep.subr.mxu0 0.0
    %394 = vmatpush1.xpose.msra.mxu0 0.0
    %395 = vmatprep.subr.mxu0 0.0
    %396 = vmatpush1.xpose.msra.mxu0 0.0
    %397 = vmatprep.subr.mxu0 0.0
    %398 = vmatpush1.xpose.msra.mxu0 0.0
    %399 = vmatprep.subr.mxu0 0.0
    %400 = vmatpush1.xpose.msra.mxu0 0.0
    %401 = vmatprep.subr.mxu0 0.0
    %402 = vmatpush1.xpose.msra.mxu0 0.0
    %403 = vmatprep.subr.mxu0 0.0
    %404 = vmatpush1.xpose.msra.mxu0 0.0
    %405 = vmatprep.subr.mxu0 0.0
    %406 = vmatpush1.xpose.msra.mxu0 0.0
    %407 = vmatprep.subr.mxu0 0.0
    %408 = vmatpush1.xpose.msra.mxu0 0.0
    %409 = vmatprep.subr.mxu0 0.0
    %410 = vmatpush1.xpose.msra.mxu0 %v377
    %411 = vmatprep.subr.mxu0 0.0
    %412 = vmatpush2.xpose.msra.mxu0 0.0
    %413 = vmatprep.subr.mxu0 0.0
    %414 = vmatpush2.xpose.msra.mxu0 0.0
    %415 = vmatprep.subr.mxu0 0.0
    %416 = vmatpush2.xpose.msra.mxu0 0.0
    %417 = vmatprep.subr.mxu0 0.0
    %418 = vmatpush2.xpose.msra.mxu0 0.0
    %419 = vmatprep.subr.mxu0 0.0
    %420 = vmatpush2.xpose.msra.mxu0 0.0
    %421 = vmatprep.subr.mxu0 0.0
    %422 = vmatpush2.xpose.msra.mxu0 0.0
    %423 = vmatprep.subr.mxu0 0.0
    %424 = vmatpush2.xpose.msra.mxu0 0.0
    %425 = vmatprep.subr.mxu0 0.0
    %426 = vmatpush2.xpose.msra.mxu0 0.0
    %427 = vmatprep.subr.mxu0 0.0
    %428 = vmatpush2.xpose.msra.mxu0 0.0
    %429 = vmatprep.subr.mxu0 0.0
    %430 = vmatpush2.xpose.msra.mxu0 0.0
    %431 = vmatprep.subr.mxu0 0.0
    %432 = vmatpush2.xpose.msra.mxu0 0.0
    %433 = vmatprep.subr.mxu0 0.0
    %434 = vmatpush2.xpose.msra.mxu0 0.0
    %435 = vmatprep.subr.mxu0 0.0
    %436 = vmatpush2.xpose.msra.mxu0 0.0
    %437 = vmatprep.subr.mxu0 0.0
    %438 = vmatpush2.xpose.msra.mxu0 0.0
    %439 = vmatprep.subr.mxu0 0.0
    %440 = vmatpush2.xpose.msra.mxu0 0.0
    %441 = vmatprep.subr.mxu0 0.0
    %442 = vmatpush2.xpose.msra.mxu0 0.0
    %443 = vmatprep.mubr.f32.mxu0 0.0
    %444 = vmatmul.mubr.f32.gmra.mxu0 %v374
    %v445 = vpop.f32.mrf.mxu0
    %v446 = vadd.f32 0.0, %v445
    %v447 = vpop.f32.mrf.mxu0
    %448 = vdwg.mxu0
    %v449 = vsel %vm372, %v446, -inf
    %450 = vmax.xlane.f32.xlu0 %v449
    %v451 = vpop.xlane.xlu0 %450
    %v452 = vsub.f32 %v446, %v451
    %v453 = vmul.f32 %v452, 1.442695
    %v454 = vpow.pop %v453
    %v455 = vsel %vm372, %v454, 0.0
    %456 = vadd.xlane.f32.xlu0 %v455
    %v457 = vpop.xlane.xlu0 %456
    %v458 = vrcp.pop %v457
    %v459 = vmul.f32 %v454, %v458
    %460 = vrot.lane.b32.xlu0 %v193, 120
    %v461 = vpop.permute.xlu0 %460
    %462 = vrot.lane.b32.xlu0 %v278, 120
    %v463 = vpop.permute.xlu0 %462
    %v464 = vsel %vm372, %v461, 0
    %v466 = vsel %vm372, %v463, 0
    %468 = vmatprep.subr.mxu0 0.0
    %469 = vmatpush1.xpose.msra.mxu0 0.0
    %470 = vmatprep.subr.mxu0 0.0
    %471 = vmatpush1.xpose.msra.mxu0 0.0
    %472 = vmatprep.subr.mxu0 0.0
    %473 = vmatpush1.xpose.msra.mxu0 0.0
    %474 = vmatprep.subr.mxu0 0.0
    %475 = vmatpush1.xpose.msra.mxu0 0.0
    %476 = vmatprep.subr.mxu0 0.0
    %477 = vmatpush1.xpose.msra.mxu0 0.0
    %478 = vmatprep.subr.mxu0 0.0
    %479 = vmatpush1.xpose.msra.mxu0 0.0
    %480 = vmatprep.subr.mxu0 0.0
    %481 = vmatpush1.xpose.msra.mxu0 0.0
    %482 = vmatprep.subr.mxu0 0.0
    %483 = vmatpush1.xpose.msra.mxu0 0.0
    %484 = vmatprep.subr.mxu0 0.0
    %485 = vmatpush1.xpose.msra.mxu0 0.0
    %486 = vmatprep.subr.mxu0 0.0
    %487 = vmatpush1.xpose.msra.mxu0 0.0
    %488 = vmatprep.subr.mxu0 0.0
    %489 = vmatpush1.xpose.msra.mxu0 0.0
    %490 = vmatprep.subr.mxu0 0.0
    %491 = vmatpush1.xpose.msra.mxu0 0.0
    %492 = vmatprep.subr.mxu0 0.0
    %493 = vmatpush1.xpose.msra.mxu0 0.0
    %494 = vmatprep.subr.mxu0 0.0
    %495 = vmatpush1.xpose.msra.mxu0 0.0
    %496 = vmatprep.subr.mxu0 0.0
    %497 = vmatpush1.xpose.msra.mxu0 0.0
    %498 = vmatprep.subr.mxu0 0.0
    %499 = vmatpush1.xpose.msra.mxu0 %v466
    %500 = vmatprep.subr.mxu0 0.0
    %501 = vmatpush2.xpose.msra.mxu0 0.0
    %502 = vmatprep.subr.mxu0 0.0
    %503 = vmatpush2.xpose.msra.mxu0 0.0
    %504 = vmatprep.subr.mxu0 0.0
    %505 = vmatpush2.xpose.msra.mxu0 0.0
    %506 = vmatprep.subr.mxu0 0.0
    %507 = vmatpush2.xpose.msra.mxu0 0.0
    %508 = vmatprep.subr.mxu0 0.0
    %509 = vmatpush2.xpose.msra.mxu0 0.0
    %510 = vmatprep.subr.mxu0 0.0
    %511 = vmatpush2.xpose.msra.mxu0 0.0
    %512 = vmatprep.subr.mxu0 0.0
    %513 = vmatpush2.xpose.msra.mxu0 0.0
    %514 = vmatprep.subr.mxu0 0.0
    %515 = vmatpush2.xpose.msra.mxu0 0.0
    %516 = vmatprep.subr.mxu0 0.0
    %517 = vmatpush2.xpose.msra.mxu0 0.0
    %518 = vmatprep.subr.mxu0 0.0
    %519 = vmatpush2.xpose.msra.mxu0 0.0
    %520 = vmatprep.subr.mxu0 0.0
    %521 = vmatpush2.xpose.msra.mxu0 0.0
    %522 = vmatprep.subr.mxu0 0.0
    %523 = vmatpush2.xpose.msra.mxu0 0.0
    %524 = vmatprep.subr.mxu0 0.0
    %525 = vmatpush2.xpose.msra.mxu0 0.0
    %526 = vmatprep.subr.mxu0 0.0
    %527 = vmatpush2.xpose.msra.mxu0 0.0
    %528 = vmatprep.subr.mxu0 0.0
    %529 = vmatpush2.xpose.msra.mxu0 0.0
    %530 = vmatprep.subr.mxu0 0.0
    %531 = vmatpush2.xpose.msra.mxu0 0.0
    %532 = vmatprep.mubr.f32.mxu0 0.0
    %533 = vmatmul.mubr.f32.gmra.mxu0 %v464
    %v534 = vpop.f32.mrf.mxu0
    %v535 = vadd.f32 0.0, %v534
    %v536 = vpop.f32.mrf.mxu0
    %537 = vdwg.mxu0
    %v538 = vsel %vm372, %v535, -inf
    %539 = vmax.xlane.f32.xlu0 %v538
    %v540 = vpop.xlane.xlu0 %539
    %v541 = vsub.f32 %v535, %v540
    %v542 = vmul.f32 %v541, 1.442695
    %v543 = vpow.pop %v542
    %v544 = vsel %vm372, %v543, 0.0
    %545 = vadd.xlane.f32.xlu0 %v544
    %v546 = vpop.xlane.xlu0 %545
    %v547 = vrcp.pop %v546
    %v548 = vmul.f32 %v543, %v547
    %550 = vrot.lane.b32.xlu0 %v363, 96
    %v551 = vpop.permute.xlu0 %550
    %v554 = vsel %vm372, %v548, 0
    %556 = vmatprep.subr.mxu0 0.0
    %557 = vmatpush1.msra.mxu0 0.0
    %558 = vmatprep.subr.mxu0 0.0
    %559 = vmatpush1.msra.mxu0 0.0
    %560 = vmatprep.subr.mxu0 0.0
    %561 = vmatpush1.msra.mxu0 0.0
    %562 = vmatprep.subr.mxu0 0.0
    %563 = vmatpush1.msra.mxu0 0.0
    %564 = vmatprep.subr.mxu0 0.0
    %565 = vmatpush1.msra.mxu0 0.0
    %566 = vmatprep.subr.mxu0 0.0
    %567 = vmatpush1.msra.mxu0 0.0
    %568 = vmatprep.subr.mxu0 0.0
    %569 = vmatpush1.msra.mxu0 0.0
    %570 = vmatprep.subr.mxu0 0.0
    %571 = vmatpush1.msra.mxu0 0.0
    %572 = vmatprep.subr.mxu0 0.0
    %573 = vmatpush1.msra.mxu0 0.0
    %574 = vmatprep.subr.mxu0 0.0
    %575 = vmatpush1.msra.mxu0 0.0
    %576 = vmatprep.subr.mxu0 0.0
    %577 = vmatpush1.msra.mxu0 0.0
    %578 = vmatprep.subr.mxu0 0.0
    %579 = vmatpush1.msra.mxu0 0.0
    %580 = vmatprep.subr.mxu0 0.0
    %581 = vmatpush1.msra.mxu0 0.0
    %582 = vmatprep.subr.mxu0 0.0
    %583 = vmatpush1.msra.mxu0 0.0
    %584 = vmatprep.subr.mxu0 0.0
    %585 = vmatpush1.msra.mxu0 0.0
    %586 = vmatprep.subr.mxu0 0.0
    %587 = vmatpush1.msra.mxu0 %v551
    %588 = vmatprep.subr.mxu0 0.0
    %589 = vmatpush2.msra.mxu0 0.0
    %590 = vmatprep.subr.mxu0 0.0
    %591 = vmatpush2.msra.mxu0 0.0
    %592 = vmatprep.subr.mxu0 0.0
    %593 = vmatpush2.msra.mxu0 0.0
    %594 = vmatprep.subr.mxu0 0.0
    %595 = vmatpush2.msra.mxu0 0.0
    %596 = vmatprep.subr.mxu0 0.0
    %597 = vmatpush2.msra.mxu0 0.0
    %598 = vmatprep.subr.mxu0 0.0
    %599 = vmatpush2.msra.mxu0 0.0
    %600 = vmatprep.subr.mxu0 0.0
    %601 = vmatpush2.msra.mxu0 0.0
    %602 = vmatprep.subr.mxu0 0.0
    %603 = vmatpush2.msra.mxu0 0.0
    %604 = vmatprep.subr.mxu0 0.0
    %605 = vmatpush2.msra.mxu0 0.0
    %606 = vmatprep.subr.mxu0 0.0
    %607 = vmatpush2.msra.mxu0 0.0
    %608 = vmatprep.subr.mxu0 0.0
    %609 = vmatpush2.msra.mxu0 0.0
    %610 = vmatprep.subr.mxu0 0.0
    %611 = vmatpush2.msra.mxu0 0.0
    %612 = vmatprep.subr.mxu0 0.0
    %613 = vmatpush2.msra.mxu0 0.0
    %614 = vmatprep.subr.mxu0 0.0
    %615 = vmatpush2.msra.mxu0 0.0
    %616 = vmatprep.subr.mxu0 0.0
    %617 = vmatpush2.msra.mxu0 0.0
    %618 = vmatprep.subr.mxu0 0.0
    %619 = vmatpush2.msra.mxu0 0.0
    %620 = vmatprep.mubr.f32.mxu0 0.0
    %621 = vmatmul.mubr.f32.gmra.mxu0 %v554
    %v622 = vpop.f32.mrf.mxu0
    %v623 = vadd.f32 0.0, %v622
    %v624 = vpop.f32.mrf.mxu0
    %625 = vdwg.mxu0
    %v627 = vsel %vm372, %v459, 0
    %629 = vmatprep.subr.mxu0 0.0
    %630 = vmatpush1.msra.mxu0 0.0
    %631 = vmatprep.subr.mxu0 0.0
    %632 = vmatpush1.msra.mxu0 0.0
    %633 = vmatprep.subr.mxu0 0.0
    %634 = vmatpush1.msra.mxu0 0.0
    %635 = vmatprep.subr.mxu0 0.0
    %636 = vmatpush1.msra.mxu0 0.0
    %637 = vmatprep.subr.mxu0 0.0
    %638 = vmatpush1.msra.mxu0 0.0
    %639 = vmatprep.subr.mxu0 0.0
    %640 = vmatpush1.msra.mxu0 0.0
    %641 = vmatprep.subr.mxu0 0.0
    %642 = vmatpush1.msra.mxu0 0.0
    %643 = vmatprep.subr.mxu0 0.0
    %644 = vmatpush1.msra.mxu0 0.0
    %645 = vmatprep.subr.mxu0 0.0
    %646 = vmatpush1.msra.mxu0 0.0
    %647 = vmatprep.subr.mxu0 0.0
    %648 = vmatpush1.msra.mxu0 0.0
    %649 = vmatprep.subr.mxu0 0.0
    %650 = vmatpush1.msra.mxu0 0.0
    %651 = vmatprep.subr.mxu0 0.0
    %652 = vmatpush1.msra.mxu0 0.0
    %653 = vmatprep.subr.mxu0 0.0
    %654 = vmatpush1.msra.mxu0 0.0
    %655 = vmatprep.subr.mxu0 0.0
    %656 = vmatpush1.msra.mxu0 0.0
    %657 = vmatprep.subr.mxu0 0.0
    %658 = vmatpush1.msra.mxu0 0.0
    %659 = vmatprep.subr.mxu0 0.0
    %660 = vmatpush1.msra.mxu0 %v363
    %661 = vmatprep.subr.mxu0 0.0
    %662 = vmatpush2.msra.mxu0 0.0
    %663 = vmatprep.subr.mxu0 0.0
    %664 = vmatpush2.msra.mxu0 0.0
    %665 = vmatprep.subr.mxu0 0.0
    %666 = vmatpush2.msra.mxu0 0.0
    %667 = vmatprep.subr.mxu0 0.0
    %668 = vmatpush2.msra.mxu0 0.0
    %669 = vmatprep.subr.mxu0 0.0
    %670 = vmatpush2.msra.mxu0 0.0
    %671 = vmatprep.subr.mxu0 0.0
    %672 = vmatpush2.msra.mxu0 0.0
    %673 = vmatprep.subr.mxu0 0.0
    %674 = vmatpush2.msra.mxu0 0.0
    %675 = vmatprep.subr.mxu0 0.0
    %676 = vmatpush2.msra.mxu0 0.0
    %677 = vmatprep.subr.mxu0 0.0
    %678 = vmatpush2.msra.mxu0 0.0
    %679 = vmatprep.subr.mxu0 0.0
    %680 = vmatpush2.msra.mxu0 0.0
    %681 = vmatprep.subr.mxu0 0.0
    %682 = vmatpush2.msra.mxu0 0.0
    %683 = vmatprep.subr.mxu0 0.0
    %684 = vmatpush2.msra.mxu0 0.0
    %685 = vmatprep.subr.mxu0 0.0
    %686 = vmatpush2.msra.mxu0 0.0
    %687 = vmatprep.subr.mxu0 0.0
    %688 = vmatpush2.msra.mxu0 0.0
    %689 = vmatprep.subr.mxu0 0.0
    %690 = vmatpush2.msra.mxu0 0.0
    %691 = vmatprep.subr.mxu0 0.0
    %692 = vmatpush2.msra.mxu0 0.0
    %693 = vmatprep.mubr.f32.mxu0 0.0
    %694 = vmatmul.mubr.f32.gmra.mxu0 %v627
    %v695 = vpop.f32.mrf.mxu0
    %v696 = vadd.f32 %v623, %v695
    %v697 = vpop.f32.mrf.mxu0
    %698 = vdwg.mxu0
    %699 = vrot.lane.b32.xlu0 %v193, 112
    %v700 = vpop.permute.xlu0 %699
    %701 = vrot.lane.b32.xlu0 %v278, 112
    %v702 = vpop.permute.xlu0 %701
    %v703 = vsel %vm372, %v700, 0
    %v705 = vsel %vm372, %v702, 0
    %707 = vmatprep.subr.mxu0 0.0
    %708 = vmatpush1.xpose.msra.mxu0 0.0
    %709 = vmatprep.subr.mxu0 0.0
    %710 = vmatpush1.xpose.msra.mxu0 0.0
    %711 = vmatprep.subr.mxu0 0.0
    %712 = vmatpush1.xpose.msra.mxu0 0.0
    %713 = vmatprep.subr.mxu0 0.0
    %714 = vmatpush1.xpose.msra.mxu0 0.0
    %715 = vmatprep.subr.mxu0 0.0
    %716 = vmatpush1.xpose.msra.mxu0 0.0
    %717 = vmatprep.subr.mxu0 0.0
    %718 = vmatpush1.xpose.msra.mxu0 0.0
    %719 = vmatprep.subr.mxu0 0.0
    %720 = vmatpush1.xpose.msra.mxu0 0.0
    %721 = vmatprep.subr.mxu0 0.0
    %722 = vmatpush1.xpose.msra.mxu0 0.0
    %723 = vmatprep.subr.mxu0 0.0
    %724 = vmatpush1.xpose.msra.mxu0 0.0
    %725 = vmatprep.subr.mxu0 0.0
    %726 = vmatpush1.xpose.msra.mxu0 0.0
    %727 = vmatprep.subr.mxu0 0.0
    %728 = vmatpush1.xpose.msra.mxu0 0.0
    %729 = vmatprep.subr.mxu0 0.0
    %730 = vmatpush1.xpose.msra.mxu0 0.0
    %731 = vmatprep.subr.mxu0 0.0
    %732 = vmatpush1.xpose.msra.mxu0 0.0
    %733 = vmatprep.subr.mxu0 0.0
    %734 = vmatpush1.xpose.msra.mxu0 0.0
    %735 = vmatprep.subr.mxu0 0.0
    %736 = vmatpush1.xpose.msra.mxu0 0.0
    %737 = vmatprep.subr.mxu0 0.0
    %738 = vmatpush1.xpose.msra.mxu0 %v705
    %739 = vmatprep.subr.mxu0 0.0
    %740 = vmatpush2.xpose.msra.mxu0 0.0
    %741 = vmatprep.subr.mxu0 0.0
    %742 = vmatpush2.xpose.msra.mxu0 0.0
    %743 = vmatprep.subr.mxu0 0.0
    %744 = vmatpush2.xpose.msra.mxu0 0.0
    %745 = vmatprep.subr.mxu0 0.0
    %746 = vmatpush2.xpose.msra.mxu0 0.0
    %747 = vmatprep.subr.mxu0 0.0
    %748 = vmatpush2.xpose.msra.mxu0 0.0
    %749 = vmatprep.subr.mxu0 0.0
    %750 = vmatpush2.xpose.msra.mxu0 0.0
    %751 = vmatprep.subr.mxu0 0.0
    %752 = vmatpush2.xpose.msra.mxu0 0.0
    %753 = vmatprep.subr.mxu0 0.0
    %754 = vmatpush2.xpose.msra.mxu0 0.0
    %755 = vmatprep.subr.mxu0 0.0
    %756 = vmatpush2.xpose.msra.mxu0 0.0
    %757 = vmatprep.subr.mxu0 0.0
    %758 = vmatpush2.xpose.msra.mxu0 0.0
    %759 = vmatprep.subr.mxu0 0.0
    %760 = vmatpush2.xpose.msra.mxu0 0.0
    %761 = vmatprep.subr.mxu0 0.0
    %762 = vmatpush2.xpose.msra.mxu0 0.0
    %763 = vmatprep.subr.mxu0 0.0
    %764 = vmatpush2.xpose.msra.mxu0 0.0
    %765 = vmatprep.subr.mxu0 0.0
    %766 = vmatpush2.xpose.msra.mxu0 0.0
    %767 = vmatprep.subr.mxu0 0.0
    %768 = vmatpush2.xpose.msra.mxu0 0.0
    %769 = vmatprep.subr.mxu0 0.0
    %770 = vmatpush2.xpose.msra.mxu0 0.0
    %771 = vmatprep.mubr.f32.mxu0 0.0
    %772 = vmatmul.mubr.f32.gmra.mxu0 %v703
    %v773 = vpop.f32.mrf.mxu0
    %v774 = vadd.f32 0.0, %v773
    %v775 = vpop.f32.mrf.mxu0
    %776 = vdwg.mxu0
    %v777 = vsel %vm372, %v774, -inf
    %778 = vmax.xlane.f32.xlu0 %v777
    %v779 = vpop.xlane.xlu0 %778
    %v780 = vsub.f32 %v774, %v779
    %v781 = vmul.f32 %v780, 1.442695
    %v782 = vpow.pop %v781
    %v783 = vsel %vm372, %v782, 0.0
    %784 = vadd.xlane.f32.xlu0 %v783
    %v785 = vpop.xlane.xlu0 %784
    %v786 = vrcp.pop %v785
    %v787 = vmul.f32 %v782, %v786
    %788 = vrot.lane.b32.xlu0 %v363, 64
    %v789 = vpop.permute.xlu0 %788
    %v792 = vsel %vm372, %v787, 0
    %794 = vmatprep.subr.mxu0 0.0
    %795 = vmatpush1.msra.mxu0 0.0
    %796 = vmatprep.subr.mxu0 0.0
    %797 = vmatpush1.msra.mxu0 0.0
    %798 = vmatprep.subr.mxu0 0.0
    %799 = vmatpush1.msra.mxu0 0.0
    %800 = vmatprep.subr.mxu0 0.0
    %801 = vmatpush1.msra.mxu0 0.0
    %802 = vmatprep.subr.mxu0 0.0
    %803 = vmatpush1.msra.mxu0 0.0
    %804 = vmatprep.subr.mxu0 0.0
    %805 = vmatpush1.msra.mxu0 0.0
    %806 = vmatprep.subr.mxu0 0.0
    %807 = vmatpush1.msra.mxu0 0.0
    %808 = vmatprep.subr.mxu0 0.0
    %809 = vmatpush1.msra.mxu0 0.0
    %810 = vmatprep.subr.mxu0 0.0
    %811 = vmatpush1.msra.mxu0 0.0
    %812 = vmatprep.subr.mxu0 0.0
    %813 = vmatpush1.msra.mxu0 0.0
    %814 = vmatprep.subr.mxu0 0.0
    %815 = vmatpush1.msra.mxu0 0.0
    %816 = vmatprep.subr.mxu0 0.0
    %817 = vmatpush1.msra.mxu0 0.0
    %818 = vmatprep.subr.mxu0 0.0
    %819 = vmatpush1.msra.mxu0 0.0
    %820 = vmatprep.subr.mxu0 0.0
    %821 = vmatpush1.msra.mxu0 0.0
    %822 = vmatprep.subr.mxu0 0.0
    %823 = vmatpush1.msra.mxu0 0.0
    %824 = vmatprep.subr.mxu0 0.0
    %825 = vmatpush1.msra.mxu0 %v789
    %826 = vmatprep.subr.mxu0 0.0
    %827 = vmatpush2.msra.mxu0 0.0
    %828 = vmatprep.subr.mxu0 0.0
    %829 = vmatpush2.msra.mxu0 0.0
    %830 = vmatprep.subr.mxu0 0.0
    %831 = vmatpush2.msra.mxu0 0.0
    %832 = vmatprep.subr.mxu0 0.0
    %833 = vmatpush2.msra.mxu0 0.0
    %834 = vmatprep.subr.mxu0 0.0
    %835 = vmatpush2.msra.mxu0 0.0
    %836 = vmatprep.subr.mxu0 0.0
    %837 = vmatpush2.msra.mxu0 0.0
    %838 = vmatprep.subr.mxu0 0.0
    %839 = vmatpush2.msra.mxu0 0.0
    %840 = vmatprep.subr.mxu0 0.0
    %841 = vmatpush2.msra.mxu0 0.0
    %842 = vmatprep.subr.mxu0 0.0
    %843 = vmatpush2.msra.mxu0 0.0
    %844 = vmatprep.subr.mxu0 0.0
    %845 = vmatpush2.msra.mxu0 0.0
    %846 = vmatprep.subr.mxu0 0.0
    %847 = vmatpush2.msra.mxu0 0.0
    %848 = vmatprep.subr.mxu0 0.0
    %849 = vmatpush2.msra.mxu0 0.0
    %850 = vmatprep.subr.mxu0 0.0
    %851 = vmatpush2.msra.mxu0 0.0
    %852 = vmatprep.subr.mxu0 0.0
    %853 = vmatpush2.msra.mxu0 0.0
    %854 = vmatprep.subr.mxu0 0.0
    %855 = vmatpush2.msra.mxu0 0.0
    %856 = vmatprep.subr.mxu0 0.0
    %857 = vmatpush2.msra.mxu0 0.0
    %858 = vmatprep.mubr.f32.mxu0 0.0
    %859 = vmatmul.mubr.f32.gmra.mxu0 %v792
    %v860 = vpop.f32.mrf.mxu0
    %v861 = vadd.f32 0.0, %v860
    %v862 = vpop.f32.mrf.mxu0
    %863 = vdwg.mxu0
    %v864 = vadd.f32 %v696, %v861
    %865 = vrot.lane.b32.xlu0 %v193, 104
    %v866 = vpop.permute.xlu0 %865
    %867 = vrot.lane.b32.xlu0 %v278, 104
    %v868 = vpop.permute.xlu0 %867
    %v869 = vsel %vm372, %v866, 0
    %v871 = vsel %vm372, %v868, 0
    %873 = vmatprep.subr.mxu0 0.0
    %874 = vmatpush1.xpose.msra.mxu0 0.0
    %875 = vmatprep.subr.mxu0 0.0
    %876 = vmatpush1.xpose.msra.mxu0 0.0
    %877 = vmatprep.subr.mxu0 0.0
    %878 = vmatpush1.xpose.msra.mxu0 0.0
    %879 = vmatprep.subr.mxu0 0.0
    %880 = vmatpush1.xpose.msra.mxu0 0.0
    %881 = vmatprep.subr.mxu0 0.0
    %882 = vmatpush1.xpose.msra.mxu0 0.0
    %883 = vmatprep.subr.mxu0 0.0
    %884 = vmatpush1.xpose.msra.mxu0 0.0
    %885 = vmatprep.subr.mxu0 0.0
    %886 = vmatpush1.xpose.msra.mxu0 0.0
    %887 = vmatprep.subr.mxu0 0.0
    %888 = vmatpush1.xpose.msra.mxu0 0.0
    %889 = vmatprep.subr.mxu0 0.0
    %890 = vmatpush1.xpose.msra.mxu0 0.0
    %891 = vmatprep.subr.mxu0 0.0
    %892 = vmatpush1.xpose.msra.mxu0 0.0
    %893 = vmatprep.subr.mxu0 0.0
    %894 = vmatpush1.xpose.msra.mxu0 0.0
    %895 = vmatprep.subr.mxu0 0.0
    %896 = vmatpush1.xpose.msra.mxu0 0.0
    %897 = vmatprep.subr.mxu0 0.0
    %898 = vmatpush1.xpose.msra.mxu0 0.0
    %899 = vmatprep.subr.mxu0 0.0
    %900 = vmatpush1.xpose.msra.mxu0 0.0
    %901 = vmatprep.subr.mxu0 0.0
    %902 = vmatpush1.xpose.msra.mxu0 0.0
    %903 = vmatprep.subr.mxu0 0.0
    %904 = vmatpush1.xpose.msra.mxu0 %v871
    %905 = vmatprep.subr.mxu0 0.0
    %906 = vmatpush2.xpose.msra.mxu0 0.0
    %907 = vmatprep.subr.mxu0 0.0
    %908 = vmatpush2.xpose.msra.mxu0 0.0
    %909 = vmatprep.subr.mxu0 0.0
    %910 = vmatpush2.xpose.msra.mxu0 0.0
    %911 = vmatprep.subr.mxu0 0.0
    %912 = vmatpush2.xpose.msra.mxu0 0.0
    %913 = vmatprep.subr.mxu0 0.0
    %914 = vmatpush2.xpose.msra.mxu0 0.0
    %915 = vmatprep.subr.mxu0 0.0
    %916 = vmatpush2.xpose.msra.mxu0 0.0
    %917 = vmatprep.subr.mxu0 0.0
    %918 = vmatpush2.xpose.msra.mxu0 0.0
    %919 = vmatprep.subr.mxu0 0.0
    %920 = vmatpush2.xpose.msra.mxu0 0.0
    %921 = vmatprep.subr.mxu0 0.0
    %922 = vmatpush2.xpose.msra.mxu0 0.0
    %923 = vmatprep.subr.mxu0 0.0
    %924 = vmatpush2.xpose.msra.mxu0 0.0
    %925 = vmatprep.subr.mxu0 0.0
    %926 = vmatpush2.xpose.msra.mxu0 0.0
    %927 = vmatprep.subr.mxu0 0.0
    %928 = vmatpush2.xpose.msra.mxu0 0.0
    %929 = vmatprep.subr.mxu0 0.0
    %930 = vmatpush2.xpose.msra.mxu0 0.0
    %931 = vmatprep.subr.mxu0 0.0
    %932 = vmatpush2.xpose.msra.mxu0 0.0
    %933 = vmatprep.subr.mxu0 0.0
    %934 = vmatpush2.xpose.msra.mxu0 0.0
    %935 = vmatprep.subr.mxu0 0.0
    %936 = vmatpush2.xpose.msra.mxu0 0.0
    %937 = vmatprep.mubr.f32.mxu0 0.0
    %938 = vmatmul.mubr.f32.gmra.mxu0 %v869
    %v939 = vpop.f32.mrf.mxu0
    %v940 = vadd.f32 0.0, %v939
    %v941 = vpop.f32.mrf.mxu0
    %942 = vdwg.mxu0
    %v943 = vsel %vm372, %v940, -inf
    %944 = vmax.xlane.f32.xlu0 %v943
    %v945 = vpop.xlane.xlu0 %944
    %v946 = vsub.f32 %v940, %v945
    %v947 = vmul.f32 %v946, 1.442695
    %v948 = vpow.pop %v947
    %v949 = vsel %vm372, %v948, 0.0
    %950 = vadd.xlane.f32.xlu0 %v949
    %v951 = vpop.xlane.xlu0 %950
    %v952 = vrcp.pop %v951
    %v953 = vmul.f32 %v948, %v952
    %954 = vrot.lane.b32.xlu0 %v363, 32
    %v955 = vpop.permute.xlu0 %954
    %v958 = vsel %vm372, %v953, 0
    %960 = vmatprep.subr.mxu0 0.0
    %961 = vmatpush1.msra.mxu0 0.0
    %962 = vmatprep.subr.mxu0 0.0
    %963 = vmatpush1.msra.mxu0 0.0
    %964 = vmatprep.subr.mxu0 0.0
    %965 = vmatpush1.msra.mxu0 0.0
    %966 = vmatprep.subr.mxu0 0.0
    %967 = vmatpush1.msra.mxu0 0.0
    %968 = vmatprep.subr.mxu0 0.0
    %969 = vmatpush1.msra.mxu0 0.0
    %970 = vmatprep.subr.mxu0 0.0
    %971 = vmatpush1.msra.mxu0 0.0
    %972 = vmatprep.subr.mxu0 0.0
    %973 = vmatpush1.msra.mxu0 0.0
    %974 = vmatprep.subr.mxu0 0.0
    %975 = vmatpush1.msra.mxu0 0.0
    %976 = vmatprep.subr.mxu0 0.0
    %977 = vmatpush1.msra.mxu0 0.0
    %978 = vmatprep.subr.mxu0 0.0
    %979 = vmatpush1.msra.mxu0 0.0
    %980 = vmatprep.subr.mxu0 0.0
    %981 = vmatpush1.msra.mxu0 0.0
    %982 = vmatprep.subr.mxu0 0.0
    %983 = vmatpush1.msra.mxu0 0.0
    %984 = vmatprep.subr.mxu0 0.0
    %985 = vmatpush1.msra.mxu0 0.0
    %986 = vmatprep.subr.mxu0 0.0
    %987 = vmatpush1.msra.mxu0 0.0
    %988 = vmatprep.subr.mxu0 0.0
    %989 = vmatpush1.msra.mxu0 0.0
    %990 = vmatprep.subr.mxu0 0.0
    %991 = vmatpush1.msra.mxu0 %v955
    %992 = vmatprep.subr.mxu0 0.0
    %993 = vmatpush2.msra.mxu0 0.0
    %994 = vmatprep.subr.mxu0 0.0
    %995 = vmatpush2.msra.mxu0 0.0
    %996 = vmatprep.subr.mxu0 0.0
    %997 = vmatpush2.msra.mxu0 0.0
    %998 = vmatprep.subr.mxu0 0.0
    %999 = vmatpush2.msra.mxu0 0.0
    %1000 = vmatprep.subr.mxu0 0.0
    %1001 = vmatpush2.msra.mxu0 0.0
    %1002 = vmatprep.subr.mxu0 0.0
    %1003 = vmatpush2.msra.mxu0 0.0
    %1004 = vmatprep.subr.mxu0 0.0
    %1005 = vmatpush2.msra.mxu0 0.0
    %1006 = vmatprep.subr.mxu0 0.0
    %1007 = vmatpush2.msra.mxu0 0.0
    %1008 = vmatprep.subr.mxu0 0.0
    %1009 = vmatpush2.msra.mxu0 0.0
    %1010 = vmatprep.subr.mxu0 0.0
    %1011 = vmatpush2.msra.mxu0 0.0
    %1012 = vmatprep.subr.mxu0 0.0
    %1013 = vmatpush2.msra.mxu0 0.0
    %1014 = vmatprep.subr.mxu0 0.0
    %1015 = vmatpush2.msra.mxu0 0.0
    %1016 = vmatprep.subr.mxu0 0.0
    %1017 = vmatpush2.msra.mxu0 0.0
    %1018 = vmatprep.subr.mxu0 0.0
    %1019 = vmatpush2.msra.mxu0 0.0
    %1020 = vmatprep.subr.mxu0 0.0
    %1021 = vmatpush2.msra.mxu0 0.0
    %1022 = vmatprep.subr.mxu0 0.0
    %1023 = vmatpush2.msra.mxu0 0.0
    %1024 = vmatprep.mubr.f32.mxu0 0.0
    %1025 = vmatmul.mubr.f32.gmra.mxu0 %v958
    %v1026 = vpop.f32.mrf.mxu0
    %v1027 = vadd.f32 0.0, %v1026
    %v1028 = vpop.f32.mrf.mxu0
    %1029 = vdwg.mxu0
    %v1030 = vadd.f32 %v864, %v1027
    %v1032 = vlaneseq
    %v1033 = vshrl.u32 %v1032, 7
    %v1034 = vsub.s32 0, %v1033
    %v1035 = vrot.slane %v371, %v1034
    %v1037 = vadd.f32 %v1030, %v1035
    %1038 = vst.msk [vmem:[#allocation13] sm:$0xff] %vm119, %v1037
    %v1040 = vsel %vm372, %v198, 0
    %v1043 = vsel %vm372, %v283, 0
    %1045 = vmatprep.subr.mxu0 0.0
    %1046 = vmatpush1.xpose.msra.mxu0 0.0
    %1047 = vmatprep.subr.mxu0 0.0
    %1048 = vmatpush1.xpose.msra.mxu0 0.0
    %1049 = vmatprep.subr.mxu0 0.0
    %1050 = vmatpush1.xpose.msra.mxu0 0.0
    %1051 = vmatprep.subr.mxu0 0.0
    %1052 = vmatpush1.xpose.msra.mxu0 0.0
    %1053 = vmatprep.subr.mxu0 0.0
    %1054 = vmatpush1.xpose.msra.mxu0 0.0
    %1055 = vmatprep.subr.mxu0 0.0
    %1056 = vmatpush1.xpose.msra.mxu0 0.0
    %1057 = vmatprep.subr.mxu0 0.0
    %1058 = vmatpush1.xpose.msra.mxu0 0.0
    %1059 = vmatprep.subr.mxu0 0.0
    %1060 = vmatpush1.xpose.msra.mxu0 0.0
    %1061 = vmatprep.subr.mxu0 0.0
    %1062 = vmatpush1.xpose.msra.mxu0 0.0
    %1063 = vmatprep.subr.mxu0 0.0
    %1064 = vmatpush1.xpose.msra.mxu0 0.0
    %1065 = vmatprep.subr.mxu0 0.0
    %1066 = vmatpush1.xpose.msra.mxu0 0.0
    %1067 = vmatprep.subr.mxu0 0.0
    %1068 = vmatpush1.xpose.msra.mxu0 0.0
    %1069 = vmatprep.subr.mxu0 0.0
    %1070 = vmatpush1.xpose.msra.mxu0 0.0
    %1071 = vmatprep.subr.mxu0 0.0
    %1072 = vmatpush1.xpose.msra.mxu0 0.0
    %1073 = vmatprep.subr.mxu0 0.0
    %1074 = vmatpush1.xpose.msra.mxu0 0.0
    %1075 = vmatprep.subr.mxu0 0.0
    %1076 = vmatpush1.xpose.msra.mxu0 %v1043
    %1077 = vmatprep.subr.mxu0 0.0
    %1078 = vmatpush2.xpose.msra.mxu0 0.0
    %1079 = vmatprep.subr.mxu0 0.0
    %1080 = vmatpush2.xpose.msra.mxu0 0.0
    %1081 = vmatprep.subr.mxu0 0.0
    %1082 = vmatpush2.xpose.msra.mxu0 0.0
    %1083 = vmatprep.subr.mxu0 0.0
    %1084 = vmatpush2.xpose.msra.mxu0 0.0
    %1085 = vmatprep.subr.mxu0 0.0
    %1086 = vmatpush2.xpose.msra.mxu0 0.0
    %1087 = vmatprep.subr.mxu0 0.0
    %1088 = vmatpush2.xpose.msra.mxu0 0.0
    %1089 = vmatprep.subr.mxu0 0.0
    %1090 = vmatpush2.xpose.msra.mxu0 0.0
    %1091 = vmatprep.subr.mxu0 0.0
    %1092 = vmatpush2.xpose.msra.mxu0 0.0
    %1093 = vmatprep.subr.mxu0 0.0
    %1094 = vmatpush2.xpose.msra.mxu0 0.0
    %1095 = vmatprep.subr.mxu0 0.0
    %1096 = vmatpush2.xpose.msra.mxu0 0.0
    %1097 = vmatprep.subr.mxu0 0.0
    %1098 = vmatpush2.xpose.msra.mxu0 0.0
    %1099 = vmatprep.subr.mxu0 0.0
    %1100 = vmatpush2.xpose.msra.mxu0 0.0
    %1101 = vmatprep.subr.mxu0 0.0
    %1102 = vmatpush2.xpose.msra.mxu0 0.0
    %1103 = vmatprep.subr.mxu0 0.0
    %1104 = vmatpush2.xpose.msra.mxu0 0.0
    %1105 = vmatprep.subr.mxu0 0.0
    %1106 = vmatpush2.xpose.msra.mxu0 0.0
    %1107 = vmatprep.subr.mxu0 0.0
    %1108 = vmatpush2.xpose.msra.mxu0 0.0
    %1109 = vmatprep.mubr.f32.mxu0 0.0
    %1110 = vmatmul.mubr.f32.gmra.mxu0 %v1040
    %v1111 = vpop.f32.mrf.mxu0
    %v1112 = vadd.f32 0.0, %v1111
    %v1113 = vpop.f32.mrf.mxu0
    %1114 = vdwg.mxu0
    %v1115 = vsel %vm372, %v1112, -inf
    %1116 = vmax.xlane.f32.xlu0 %v1115
    %v1117 = vpop.xlane.xlu0 %1116
    %v1118 = vsub.f32 %v1112, %v1117
    %v1119 = vmul.f32 %v1118, 1.442695
    %v1120 = vpow.pop %v1119
    %v1121 = vsel %vm372, %v1120, 0.0
    %1122 = vadd.xlane.f32.xlu0 %v1121
    %v1123 = vpop.xlane.xlu0 %1122
    %v1124 = vrcp.pop %v1123
    %v1125 = vmul.f32 %v1120, %v1124
    %1126 = vrot.lane.b32.xlu0 %v198, 120
    %v1127 = vpop.permute.xlu0 %1126
    %1128 = vrot.lane.b32.xlu0 %v283, 120
    %v1129 = vpop.permute.xlu0 %1128
    %v1130 = vsel %vm372, %v1127, 0
    %v1132 = vsel %vm372, %v1129, 0
    %1134 = vmatprep.subr.mxu0 0.0
    %1135 = vmatpush1.xpose.msra.mxu0 0.0
    %1136 = vmatprep.subr.mxu0 0.0
    %1137 = vmatpush1.xpose.msra.mxu0 0.0
    %1138 = vmatprep.subr.mxu0 0.0
    %1139 = vmatpush1.xpose.msra.mxu0 0.0
    %1140 = vmatprep.subr.mxu0 0.0
    %1141 = vmatpush1.xpose.msra.mxu0 0.0
    %1142 = vmatprep.subr.mxu0 0.0
    %1143 = vmatpush1.xpose.msra.mxu0 0.0
    %1144 = vmatprep.subr.mxu0 0.0
    %1145 = vmatpush1.xpose.msra.mxu0 0.0
    %1146 = vmatprep.subr.mxu0 0.0
    %1147 = vmatpush1.xpose.msra.mxu0 0.0
    %1148 = vmatprep.subr.mxu0 0.0
    %1149 = vmatpush1.xpose.msra.mxu0 0.0
    %1150 = vmatprep.subr.mxu0 0.0
    %1151 = vmatpush1.xpose.msra.mxu0 0.0
    %1152 = vmatprep.subr.mxu0 0.0
    %1153 = vmatpush1.xpose.msra.mxu0 0.0
    %1154 = vmatprep.subr.mxu0 0.0
    %1155 = vmatpush1.xpose.msra.mxu0 0.0
    %1156 = vmatprep.subr.mxu0 0.0
    %1157 = vmatpush1.xpose.msra.mxu0 0.0
    %1158 = vmatprep.subr.mxu0 0.0
    %1159 = vmatpush1.xpose.msra.mxu0 0.0
    %1160 = vmatprep.subr.mxu0 0.0
    %1161 = vmatpush1.xpose.msra.mxu0 0.0
    %1162 = vmatprep.subr.mxu0 0.0
    %1163 = vmatpush1.xpose.msra.mxu0 0.0
    %1164 = vmatprep.subr.mxu0 0.0
    %1165 = vmatpush1.xpose.msra.mxu0 %v1132
    %1166 = vmatprep.subr.mxu0 0.0
    %1167 = vmatpush2.xpose.msra.mxu0 0.0
    %1168 = vmatprep.subr.mxu0 0.0
    %1169 = vmatpush2.xpose.msra.mxu0 0.0
    %1170 = vmatprep.subr.mxu0 0.0
    %1171 = vmatpush2.xpose.msra.mxu0 0.0
    %1172 = vmatprep.subr.mxu0 0.0
    %1173 = vmatpush2.xpose.msra.mxu0 0.0
    %1174 = vmatprep.subr.mxu0 0.0
    %1175 = vmatpush2.xpose.msra.mxu0 0.0
    %1176 = vmatprep.subr.mxu0 0.0
    %1177 = vmatpush2.xpose.msra.mxu0 0.0
    %1178 = vmatprep.subr.mxu0 0.0
    %1179 = vmatpush2.xpose.msra.mxu0 0.0
    %1180 = vmatprep.subr.mxu0 0.0
    %1181 = vmatpush2.xpose.msra.mxu0 0.0
    %1182 = vmatprep.subr.mxu0 0.0
    %1183 = vmatpush2.xpose.msra.mxu0 0.0
    %1184 = vmatprep.subr.mxu0 0.0
    %1185 = vmatpush2.xpose.msra.mxu0 0.0
    %1186 = vmatprep.subr.mxu0 0.0
    %1187 = vmatpush2.xpose.msra.mxu0 0.0
    %1188 = vmatprep.subr.mxu0 0.0
    %1189 = vmatpush2.xpose.msra.mxu0 0.0
    %1190 = vmatprep.subr.mxu0 0.0
    %1191 = vmatpush2.xpose.msra.mxu0 0.0
    %1192 = vmatprep.subr.mxu0 0.0
    %1193 = vmatpush2.xpose.msra.mxu0 0.0
    %1194 = vmatprep.subr.mxu0 0.0
    %1195 = vmatpush2.xpose.msra.mxu0 0.0
    %1196 = vmatprep.subr.mxu0 0.0
    %1197 = vmatpush2.xpose.msra.mxu0 0.0
    %1198 = vmatprep.mubr.f32.mxu0 0.0
    %1199 = vmatmul.mubr.f32.gmra.mxu0 %v1130
    %v1200 = vpop.f32.mrf.mxu0
    %v1201 = vadd.f32 0.0, %v1200
    %v1202 = vpop.f32.mrf.mxu0
    %1203 = vdwg.mxu0
    %v1204 = vsel %vm372, %v1201, -inf
    %1205 = vmax.xlane.f32.xlu0 %v1204
    %v1206 = vpop.xlane.xlu0 %1205
    %v1207 = vsub.f32 %v1201, %v1206
    %v1208 = vmul.f32 %v1207, 1.442695
    %v1209 = vpow.pop %v1208
    %v1210 = vsel %vm372, %v1209, 0.0
    %1211 = vadd.xlane.f32.xlu0 %v1210
    %v1212 = vpop.xlane.xlu0 %1211
    %v1213 = vrcp.pop %v1212
    %v1214 = vmul.f32 %v1209, %v1213
    %1216 = vrot.lane.b32.xlu0 %v368, 96
    %v1217 = vpop.permute.xlu0 %1216
    %v1220 = vsel %vm372, %v1214, 0
    %1222 = vmatprep.subr.mxu0 0.0
    %1223 = vmatpush1.msra.mxu0 0.0
    %1224 = vmatprep.subr.mxu0 0.0
    %1225 = vmatpush1.msra.mxu0 0.0
    %1226 = vmatprep.subr.mxu0 0.0
    %1227 = vmatpush1.msra.mxu0 0.0
    %1228 = vmatprep.subr.mxu0 0.0
    %1229 = vmatpush1.msra.mxu0 0.0
    %1230 = vmatprep.subr.mxu0 0.0
    %1231 = vmatpush1.msra.mxu0 0.0
    %1232 = vmatprep.subr.mxu0 0.0
    %1233 = vmatpush1.msra.mxu0 0.0
    %1234 = vmatprep.subr.mxu0 0.0
    %1235 = vmatpush1.msra.mxu0 0.0
    %1236 = vmatprep.subr.mxu0 0.0
    %1237 = vmatpush1.msra.mxu0 0.0
    %1238 = vmatprep.subr.mxu0 0.0
    %1239 = vmatpush1.msra.mxu0 0.0
    %1240 = vmatprep.subr.mxu0 0.0
    %1241 = vmatpush1.msra.mxu0 0.0
    %1242 = vmatprep.subr.mxu0 0.0
    %1243 = vmatpush1.msra.mxu0 0.0
    %1244 = vmatprep.subr.mxu0 0.0
    %1245 = vmatpush1.msra.mxu0 0.0
    %1246 = vmatprep.subr.mxu0 0.0
    %1247 = vmatpush1.msra.mxu0 0.0
    %1248 = vmatprep.subr.mxu0 0.0
    %1249 = vmatpush1.msra.mxu0 0.0
    %1250 = vmatprep.subr.mxu0 0.0
    %1251 = vmatpush1.msra.mxu0 0.0
    %1252 = vmatprep.subr.mxu0 0.0
    %1253 = vmatpush1.msra.mxu0 %v1217
    %1254 = vmatprep.subr.mxu0 0.0
    %1255 = vmatpush2.msra.mxu0 0.0
    %1256 = vmatprep.subr.mxu0 0.0
    %1257 = vmatpush2.msra.mxu0 0.0
    %1258 = vmatprep.subr.mxu0 0.0
    %1259 = vmatpush2.msra.mxu0 0.0
    %1260 = vmatprep.subr.mxu0 0.0
    %1261 = vmatpush2.msra.mxu0 0.0
    %1262 = vmatprep.subr.mxu0 0.0
    %1263 = vmatpush2.msra.mxu0 0.0
    %1264 = vmatprep.subr.mxu0 0.0
    %1265 = vmatpush2.msra.mxu0 0.0
    %1266 = vmatprep.subr.mxu0 0.0
    %1267 = vmatpush2.msra.mxu0 0.0
    %1268 = vmatprep.subr.mxu0 0.0
    %1269 = vmatpush2.msra.mxu0 0.0
    %1270 = vmatprep.subr.mxu0 0.0
    %1271 = vmatpush2.msra.mxu0 0.0
    %1272 = vmatprep.subr.mxu0 0.0
    %1273 = vmatpush2.msra.mxu0 0.0
    %1274 = vmatprep.subr.mxu0 0.0
    %1275 = vmatpush2.msra.mxu0 0.0
    %1276 = vmatprep.subr.mxu0 0.0
    %1277 = vmatpush2.msra.mxu0 0.0
    %1278 = vmatprep.subr.mxu0 0.0
    %1279 = vmatpush2.msra.mxu0 0.0
    %1280 = vmatprep.subr.mxu0 0.0
    %1281 = vmatpush2.msra.mxu0 0.0
    %1282 = vmatprep.subr.mxu0 0.0
    %1283 = vmatpush2.msra.mxu0 0.0
    %1284 = vmatprep.subr.mxu0 0.0
    %1285 = vmatpush2.msra.mxu0 0.0
    %1286 = vmatprep.mubr.f32.mxu0 0.0
    %1287 = vmatmul.mubr.f32.gmra.mxu0 %v1220
    %v1288 = vpop.f32.mrf.mxu0
    %v1289 = vadd.f32 0.0, %v1288
    %v1290 = vpop.f32.mrf.mxu0
    %1291 = vdwg.mxu0
    %v1293 = vsel %vm372, %v1125, 0
    %1295 = vmatprep.subr.mxu0 0.0
    %1296 = vmatpush1.msra.mxu0 0.0
    %1297 = vmatprep.subr.mxu0 0.0
    %1298 = vmatpush1.msra.mxu0 0.0
    %1299 = vmatprep.subr.mxu0 0.0
    %1300 = vmatpush1.msra.mxu0 0.0
    %1301 = vmatprep.subr.mxu0 0.0
    %1302 = vmatpush1.msra.mxu0 0.0
    %1303 = vmatprep.subr.mxu0 0.0
    %1304 = vmatpush1.msra.mxu0 0.0
    %1305 = vmatprep.subr.mxu0 0.0
    %1306 = vmatpush1.msra.mxu0 0.0
    %1307 = vmatprep.subr.mxu0 0.0
    %1308 = vmatpush1.msra.mxu0 0.0
    %1309 = vmatprep.subr.mxu0 0.0
    %1310 = vmatpush1.msra.mxu0 0.0
    %1311 = vmatprep.subr.mxu0 0.0
    %1312 = vmatpush1.msra.mxu0 0.0
    %1313 = vmatprep.subr.mxu0 0.0
    %1314 = vmatpush1.msra.mxu0 0.0
    %1315 = vmatprep.subr.mxu0 0.0
    %1316 = vmatpush1.msra.mxu0 0.0
    %1317 = vmatprep.subr.mxu0 0.0
    %1318 = vmatpush1.msra.mxu0 0.0
    %1319 = vmatprep.subr.mxu0 0.0
    %1320 = vmatpush1.msra.mxu0 0.0
    %1321 = vmatprep.subr.mxu0 0.0
    %1322 = vmatpush1.msra.mxu0 0.0
    %1323 = vmatprep.subr.mxu0 0.0
    %1324 = vmatpush1.msra.mxu0 0.0
    %1325 = vmatprep.subr.mxu0 0.0
    %1326 = vmatpush1.msra.mxu0 %v368
    %1327 = vmatprep.subr.mxu0 0.0
    %1328 = vmatpush2.msra.mxu0 0.0
    %1329 = vmatprep.subr.mxu0 0.0
    %1330 = vmatpush2.msra.mxu0 0.0
    %1331 = vmatprep.subr.mxu0 0.0
    %1332 = vmatpush2.msra.mxu0 0.0
    %1333 = vmatprep.subr.mxu0 0.0
    %1334 = vmatpush2.msra.mxu0 0.0
    %1335 = vmatprep.subr.mxu0 0.0
    %1336 = vmatpush2.msra.mxu0 0.0
    %1337 = vmatprep.subr.mxu0 0.0
    %1338 = vmatpush2.msra.mxu0 0.0
    %1339 = vmatprep.subr.mxu0 0.0
    %1340 = vmatpush2.msra.mxu0 0.0
    %1341 = vmatprep.subr.mxu0 0.0
    %1342 = vmatpush2.msra.mxu0 0.0
    %1343 = vmatprep.subr.mxu0 0.0
    %1344 = vmatpush2.msra.mxu0 0.0
    %1345 = vmatprep.subr.mxu0 0.0
    %1346 = vmatpush2.msra.mxu0 0.0
    %1347 = vmatprep.subr.mxu0 0.0
    %1348 = vmatpush2.msra.mxu0 0.0
    %1349 = vmatprep.subr.mxu0 0.0
    %1350 = vmatpush2.msra.mxu0 0.0
    %1351 = vmatprep.subr.mxu0 0.0
    %1352 = vmatpush2.msra.mxu0 0.0
    %1353 = vmatprep.subr.mxu0 0.0
    %1354 = vmatpush2.msra.mxu0 0.0
    %1355 = vmatprep.subr.mxu0 0.0
    %1356 = vmatpush2.msra.mxu0 0.0
    %1357 = vmatprep.subr.mxu0 0.0
    %1358 = vmatpush2.msra.mxu0 0.0
    %1359 = vmatprep.mubr.f32.mxu0 0.0
    %1360 = vmatmul.mubr.f32.gmra.mxu0 %v1293
    %v1361 = vpop.f32.mrf.mxu0
    %v1362 = vadd.f32 %v1289, %v1361
    %v1363 = vpop.f32.mrf.mxu0
    %1364 = vdwg.mxu0
    %1365 = vrot.lane.b32.xlu0 %v198, 112
    %v1366 = vpop.permute.xlu0 %1365
    %1367 = vrot.lane.b32.xlu0 %v283, 112
    %v1368 = vpop.permute.xlu0 %1367
    %v1369 = vsel %vm372, %v1366, 0
    %v1371 = vsel %vm372, %v1368, 0
    %1373 = vmatprep.subr.mxu0 0.0
    %1374 = vmatpush1.xpose.msra.mxu0 0.0
    %1375 = vmatprep.subr.mxu0 0.0
    %1376 = vmatpush1.xpose.msra.mxu0 0.0
    %1377 = vmatprep.subr.mxu0 0.0
    %1378 = vmatpush1.xpose.msra.mxu0 0.0
    %1379 = vmatprep.subr.mxu0 0.0
    %1380 = vmatpush1.xpose.msra.mxu0 0.0
    %1381 = vmatprep.subr.mxu0 0.0
    %1382 = vmatpush1.xpose.msra.mxu0 0.0
    %1383 = vmatprep.subr.mxu0 0.0
    %1384 = vmatpush1.xpose.msra.mxu0 0.0
    %1385 = vmatprep.subr.mxu0 0.0
    %1386 = vmatpush1.xpose.msra.mxu0 0.0
    %1387 = vmatprep.subr.mxu0 0.0
    %1388 = vmatpush1.xpose.msra.mxu0 0.0
    %1389 = vmatprep.subr.mxu0 0.0
    %1390 = vmatpush1.xpose.msra.mxu0 0.0
    %1391 = vmatprep.subr.mxu0 0.0
    %1392 = vmatpush1.xpose.msra.mxu0 0.0
    %1393 = vmatprep.subr.mxu0 0.0
    %1394 = vmatpush1.xpose.msra.mxu0 0.0
    %1395 = vmatprep.subr.mxu0 0.0
    %1396 = vmatpush1.xpose.msra.mxu0 0.0
    %1397 = vmatprep.subr.mxu0 0.0
    %1398 = vmatpush1.xpose.msra.mxu0 0.0
    %1399 = vmatprep.subr.mxu0 0.0
    %1400 = vmatpush1.xpose.msra.mxu0 0.0
    %1401 = vmatprep.subr.mxu0 0.0
    %1402 = vmatpush1.xpose.msra.mxu0 0.0
    %1403 = vmatprep.subr.mxu0 0.0
    %1404 = vmatpush1.xpose.msra.mxu0 %v1371
    %1405 = vmatprep.subr.mxu0 0.0
    %1406 = vmatpush2.xpose.msra.mxu0 0.0
    %1407 = vmatprep.subr.mxu0 0.0
    %1408 = vmatpush2.xpose.msra.mxu0 0.0
    %1409 = vmatprep.subr.mxu0 0.0
    %1410 = vmatpush2.xpose.msra.mxu0 0.0
    %1411 = vmatprep.subr.mxu0 0.0
    %1412 = vmatpush2.xpose.msra.mxu0 0.0
    %1413 = vmatprep.subr.mxu0 0.0
    %1414 = vmatpush2.xpose.msra.mxu0 0.0
    %1415 = vmatprep.subr.mxu0 0.0
    %1416 = vmatpush2.xpose.msra.mxu0 0.0
    %1417 = vmatprep.subr.mxu0 0.0
    %1418 = vmatpush2.xpose.msra.mxu0 0.0
    %1419 = vmatprep.subr.mxu0 0.0
    %1420 = vmatpush2.xpose.msra.mxu0 0.0
    %1421 = vmatprep.subr.mxu0 0.0
    %1422 = vmatpush2.xpose.msra.mxu0 0.0
    %1423 = vmatprep.subr.mxu0 0.0
    %1424 = vmatpush2.xpose.msra.mxu0 0.0
    %1425 = vmatprep.subr.mxu0 0.0
    %1426 = vmatpush2.xpose.msra.mxu0 0.0
    %1427 = vmatprep.subr.mxu0 0.0
    %1428 = vmatpush2.xpose.msra.mxu0 0.0
    %1429 = vmatprep.subr.mxu0 0.0
    %1430 = vmatpush2.xpose.msra.mxu0 0.0
    %1431 = vmatprep.subr.mxu0 0.0
    %1432 = vmatpush2.xpose.msra.mxu0 0.0
    %1433 = vmatprep.subr.mxu0 0.0
    %1434 = vmatpush2.xpose.msra.mxu0 0.0
    %1435 = vmatprep.subr.mxu0 0.0
    %1436 = vmatpush2.xpose.msra.mxu0 0.0
    %1437 = vmatprep.mubr.f32.mxu0 0.0
    %1438 = vmatmul.mubr.f32.gmra.mxu0 %v1369
    %v1439 = vpop.f32.mrf.mxu0
    %v1440 = vadd.f32 0.0, %v1439
    %v1441 = vpop.f32.mrf.mxu0
    %1442 = vdwg.mxu0
    %v1443 = vsel %vm372, %v1440, -inf
    %1444 = vmax.xlane.f32.xlu0 %v1443
    %v1445 = vpop.xlane.xlu0 %1444
    %v1446 = vsub.f32 %v1440, %v1445
    %v1447 = vmul.f32 %v1446, 1.442695
    %v1448 = vpow.pop %v1447
    %v1449 = vsel %vm372, %v1448, 0.0
    %1450 = vadd.xlane.f32.xlu0 %v1449
    %v1451 = vpop.xlane.xlu0 %1450
    %v1452 = vrcp.pop %v1451
    %v1453 = vmul.f32 %v1448, %v1452
    %1454 = vrot.lane.b32.xlu0 %v368, 64
    %v1455 = vpop.permute.xlu0 %1454
    %v1458 = vsel %vm372, %v1453, 0
    %1460 = vmatprep.subr.mxu0 0.0
    %1461 = vmatpush1.msra.mxu0 0.0
    %1462 = vmatprep.subr.mxu0 0.0
    %1463 = vmatpush1.msra.mxu0 0.0
    %1464 = vmatprep.subr.mxu0 0.0
    %1465 = vmatpush1.msra.mxu0 0.0
    %1466 = vmatprep.subr.mxu0 0.0
    %1467 = vmatpush1.msra.mxu0 0.0
    %1468 = vmatprep.subr.mxu0 0.0
    %1469 = vmatpush1.msra.mxu0 0.0
    %1470 = vmatprep.subr.mxu0 0.0
    %1471 = vmatpush1.msra.mxu0 0.0
    %1472 = vmatprep.subr.mxu0 0.0
    %1473 = vmatpush1.msra.mxu0 0.0
    %1474 = vmatprep.subr.mxu0 0.0
    %1475 = vmatpush1.msra.mxu0 0.0
    %1476 = vmatprep.subr.mxu0 0.0
    %1477 = vmatpush1.msra.mxu0 0.0
    %1478 = vmatprep.subr.mxu0 0.0
    %1479 = vmatpush1.msra.mxu0 0.0
    %1480 = vmatprep.subr.mxu0 0.0
    %1481 = vmatpush1.msra.mxu0 0.0
    %1482 = vmatprep.subr.mxu0 0.0
    %1483 = vmatpush1.msra.mxu0 0.0
    %1484 = vmatprep.subr.mxu0 0.0
    %1485 = vmatpush1.msra.mxu0 0.0
    %1486 = vmatprep.subr.mxu0 0.0
    %1487 = vmatpush1.msra.mxu0 0.0
    %1488 = vmatprep.subr.mxu0 0.0
    %1489 = vmatpush1.msra.mxu0 0.0
    %1490 = vmatprep.subr.mxu0 0.0
    %1491 = vmatpush1.msra.mxu0 %v1455
    %1492 = vmatprep.subr.mxu0 0.0
    %1493 = vmatpush2.msra.mxu0 0.0
    %1494 = vmatprep.subr.mxu0 0.0
    %1495 = vmatpush2.msra.mxu0 0.0
    %1496 = vmatprep.subr.mxu0 0.0
    %1497 = vmatpush2.msra.mxu0 0.0
    %1498 = vmatprep.subr.mxu0 0.0
    %1499 = vmatpush2.msra.mxu0 0.0
    %1500 = vmatprep.subr.mxu0 0.0
    %1501 = vmatpush2.msra.mxu0 0.0
    %1502 = vmatprep.subr.mxu0 0.0
    %1503 = vmatpush2.msra.mxu0 0.0
    %1504 = vmatprep.subr.mxu0 0.0
    %1505 = vmatpush2.msra.mxu0 0.0
    %1506 = vmatprep.subr.mxu0 0.0
    %1507 = vmatpush2.msra.mxu0 0.0
    %1508 = vmatprep.subr.mxu0 0.0
    %1509 = vmatpush2.msra.mxu0 0.0
    %1510 = vmatprep.subr.mxu0 0.0
    %1511 = vmatpush2.msra.mxu0 0.0
    %1512 = vmatprep.subr.mxu0 0.0
    %1513 = vmatpush2.msra.mxu0 0.0
    %1514 = vmatprep.subr.mxu0 0.0
    %1515 = vmatpush2.msra.mxu0 0.0
    %1516 = vmatprep.subr.mxu0 0.0
    %1517 = vmatpush2.msra.mxu0 0.0
    %1518 = vmatprep.subr.mxu0 0.0
    %1519 = vmatpush2.msra.mxu0 0.0
    %1520 = vmatprep.subr.mxu0 0.0
    %1521 = vmatpush2.msra.mxu0 0.0
    %1522 = vmatprep.subr.mxu0 0.0
    %1523 = vmatpush2.msra.mxu0 0.0
    %1524 = vmatprep.mubr.f32.mxu0 0.0
    %1525 = vmatmul.mubr.f32.gmra.mxu0 %v1458
    %v1526 = vpop.f32.mrf.mxu0
    %v1527 = vadd.f32 0.0, %v1526
    %v1528 = vpop.f32.mrf.mxu0
    %1529 = vdwg.mxu0
    %v1530 = vadd.f32 %v1362, %v1527
    %1531 = vrot.lane.b32.xlu0 %v198, 104
    %v1532 = vpop.permute.xlu0 %1531
    %1533 = vrot.lane.b32.xlu0 %v283, 104
    %v1534 = vpop.permute.xlu0 %1533
    %v1535 = vsel %vm372, %v1532, 0
    %v1537 = vsel %vm372, %v1534, 0
    %1539 = vmatprep.subr.mxu0 0.0
    %1540 = vmatpush1.xpose.msra.mxu0 0.0
    %1541 = vmatprep.subr.mxu0 0.0
    %1542 = vmatpush1.xpose.msra.mxu0 0.0
    %1543 = vmatprep.subr.mxu0 0.0
    %1544 = vmatpush1.xpose.msra.mxu0 0.0
    %1545 = vmatprep.subr.mxu0 0.0
    %1546 = vmatpush1.xpose.msra.mxu0 0.0
    %1547 = vmatprep.subr.mxu0 0.0
    %1548 = vmatpush1.xpose.msra.mxu0 0.0
    %1549 = vmatprep.subr.mxu0 0.0
    %1550 = vmatpush1.xpose.msra.mxu0 0.0
    %1551 = vmatprep.subr.mxu0 0.0
    %1552 = vmatpush1.xpose.msra.mxu0 0.0
    %1553 = vmatprep.subr.mxu0 0.0
    %1554 = vmatpush1.xpose.msra.mxu0 0.0
    %1555 = vmatprep.subr.mxu0 0.0
    %1556 = vmatpush1.xpose.msra.mxu0 0.0
    %1557 = vmatprep.subr.mxu0 0.0
    %1558 = vmatpush1.xpose.msra.mxu0 0.0
    %1559 = vmatprep.subr.mxu0 0.0
    %1560 = vmatpush1.xpose.msra.mxu0 0.0
    %1561 = vmatprep.subr.mxu0 0.0
    %1562 = vmatpush1.xpose.msra.mxu0 0.0
    %1563 = vmatprep.subr.mxu0 0.0
    %1564 = vmatpush1.xpose.msra.mxu0 0.0
    %1565 = vmatprep.subr.mxu0 0.0
    %1566 = vmatpush1.xpose.msra.mxu0 0.0
    %1567 = vmatprep.subr.mxu0 0.0
    %1568 = vmatpush1.xpose.msra.mxu0 0.0
    %1569 = vmatprep.subr.mxu0 0.0
    %1570 = vmatpush1.xpose.msra.mxu0 %v1537
    %1571 = vmatprep.subr.mxu0 0.0
    %1572 = vmatpush2.xpose.msra.mxu0 0.0
    %1573 = vmatprep.subr.mxu0 0.0
    %1574 = vmatpush2.xpose.msra.mxu0 0.0
    %1575 = vmatprep.subr.mxu0 0.0
    %1576 = vmatpush2.xpose.msra.mxu0 0.0
    %1577 = vmatprep.subr.mxu0 0.0
    %1578 = vmatpush2.xpose.msra.mxu0 0.0
    %1579 = vmatprep.subr.mxu0 0.0
    %1580 = vmatpush2.xpose.msra.mxu0 0.0
    %1581 = vmatprep.subr.mxu0 0.0
    %1582 = vmatpush2.xpose.msra.mxu0 0.0
    %1583 = vmatprep.subr.mxu0 0.0
    %1584 = vmatpush2.xpose.msra.mxu0 0.0
    %1585 = vmatprep.subr.mxu0 0.0
    %1586 = vmatpush2.xpose.msra.mxu0 0.0
    %1587 = vmatprep.subr.mxu0 0.0
    %1588 = vmatpush2.xpose.msra.mxu0 0.0
    %1589 = vmatprep.subr.mxu0 0.0
    %1590 = vmatpush2.xpose.msra.mxu0 0.0
    %1591 = vmatprep.subr.mxu0 0.0
    %1592 = vmatpush2.xpose.msra.mxu0 0.0
    %1593 = vmatprep.subr.mxu0 0.0
    %1594 = vmatpush2.xpose.msra.mxu0 0.0
    %1595 = vmatprep.subr.mxu0 0.0
    %1596 = vmatpush2.xpose.msra.mxu0 0.0
    %1597 = vmatprep.subr.mxu0 0.0
    %1598 = vmatpush2.xpose.msra.mxu0 0.0
    %1599 = vmatprep.subr.mxu0 0.0
    %1600 = vmatpush2.xpose.msra.mxu0 0.0
    %1601 = vmatprep.subr.mxu0 0.0
    %1602 = vmatpush2.xpose.msra.mxu0 0.0
    %1603 = vmatprep.mubr.f32.mxu0 0.0
    %1604 = vmatmul.mubr.f32.gmra.mxu0 %v1535
    %v1605 = vpop.f32.mrf.mxu0
    %v1606 = vadd.f32 0.0, %v1605
    %v1607 = vpop.f32.mrf.mxu0
    %1608 = vdwg.mxu0
    %v1609 = vsel %vm372, %v1606, -inf
    %1610 = vmax.xlane.f32.xlu0 %v1609
    %v1611 = vpop.xlane.xlu0 %1610
    %v1612 = vsub.f32 %v1606, %v1611
    %v1613 = vmul.f32 %v1612, 1.442695
    %v1614 = vpow.pop %v1613
    %v1615 = vsel %vm372, %v1614, 0.0
    %1616 = vadd.xlane.f32.xlu0 %v1615
    %v1617 = vpop.xlane.xlu0 %1616
    %v1618 = vrcp.pop %v1617
    %v1619 = vmul.f32 %v1614, %v1618
    %1620 = vrot.lane.b32.xlu0 %v368, 32
    %v1621 = vpop.permute.xlu0 %1620
    %v1624 = vsel %vm372, %v1619, 0
    %1626 = vmatprep.subr.mxu0 0.0
    %1627 = vmatpush1.msra.mxu0 0.0
    %1628 = vmatprep.subr.mxu0 0.0
    %1629 = vmatpush1.msra.mxu0 0.0
    %1630 = vmatprep.subr.mxu0 0.0
    %1631 = vmatpush1.msra.mxu0 0.0
    %1632 = vmatprep.subr.mxu0 0.0
    %1633 = vmatpush1.msra.mxu0 0.0
    %1634 = vmatprep.subr.mxu0 0.0
    %1635 = vmatpush1.msra.mxu0 0.0
    %1636 = vmatprep.subr.mxu0 0.0
    %1637 = vmatpush1.msra.mxu0 0.0
    %1638 = vmatprep.subr.mxu0 0.0
    %1639 = vmatpush1.msra.mxu0 0.0
    %1640 = vmatprep.subr.mxu0 0.0
    %1641 = vmatpush1.msra.mxu0 0.0
    %1642 = vmatprep.subr.mxu0 0.0
    %1643 = vmatpush1.msra.mxu0 0.0
    %1644 = vmatprep.subr.mxu0 0.0
    %1645 = vmatpush1.msra.mxu0 0.0
    %1646 = vmatprep.subr.mxu0 0.0
    %1647 = vmatpush1.msra.mxu0 0.0
    %1648 = vmatprep.subr.mxu0 0.0
    %1649 = vmatpush1.msra.mxu0 0.0
    %1650 = vmatprep.subr.mxu0 0.0
    %1651 = vmatpush1.msra.mxu0 0.0
    %1652 = vmatprep.subr.mxu0 0.0
    %1653 = vmatpush1.msra.mxu0 0.0
    %1654 = vmatprep.subr.mxu0 0.0
    %1655 = vmatpush1.msra.mxu0 0.0
    %1656 = vmatprep.subr.mxu0 0.0
    %1657 = vmatpush1.msra.mxu0 %v1621
    %1658 = vmatprep.subr.mxu0 0.0
    %1659 = vmatpush2.msra.mxu0 0.0
    %1660 = vmatprep.subr.mxu0 0.0
    %1661 = vmatpush2.msra.mxu0 0.0
    %1662 = vmatprep.subr.mxu0 0.0
    %1663 = vmatpush2.msra.mxu0 0.0
    %1664 = vmatprep.subr.mxu0 0.0
    %1665 = vmatpush2.msra.mxu0 0.0
    %1666 = vmatprep.subr.mxu0 0.0
    %1667 = vmatpush2.msra.mxu0 0.0
    %1668 = vmatprep.subr.mxu0 0.0
    %1669 = vmatpush2.msra.mxu0 0.0
    %1670 = vmatprep.subr.mxu0 0.0
    %1671 = vmatpush2.msra.mxu0 0.0
    %1672 = vmatprep.subr.mxu0 0.0
    %1673 = vmatpush2.msra.mxu0 0.0
    %1674 = vmatprep.subr.mxu0 0.0
    %1675 = vmatpush2.msra.mxu0 0.0
    %1676 = vmatprep.subr.mxu0 0.0
    %1677 = vmatpush2.msra.mxu0 0.0
    %1678 = vmatprep.subr.mxu0 0.0
    %1679 = vmatpush2.msra.mxu0 0.0
    %1680 = vmatprep.subr.mxu0 0.0
    %1681 = vmatpush2.msra.mxu0 0.0
    %1682 = vmatprep.subr.mxu0 0.0
    %1683 = vmatpush2.msra.mxu0 0.0
    %1684 = vmatprep.subr.mxu0 0.0
    %1685 = vmatpush2.msra.mxu0 0.0
    %1686 = vmatprep.subr.mxu0 0.0
    %1687 = vmatpush2.msra.mxu0 0.0
    %1688 = vmatprep.subr.mxu0 0.0
    %1689 = vmatpush2.msra.mxu0 0.0
    %1690 = vmatprep.mubr.f32.mxu0 0.0
    %1691 = vmatmul.mubr.f32.gmra.mxu0 %v1624
    %v1692 = vpop.f32.mrf.mxu0
    %v1693 = vadd.f32 0.0, %v1692
    %v1694 = vpop.f32.mrf.mxu0
    %1695 = vdwg.mxu0
    %v1696 = vadd.f32 %v1530, %v1693
    %v1697 = vadd.f32 %v1696, %v1035
    %1698 = vst.msk [vmem:[#allocation13 + $0x8] sm:$0xff] %vm119, %v1697
    // Predicated region
    $region54: #{tpu_custom_call.1} parent=1 // pred_check
      _
    $region55: #{tpu_custom_call.1} parent=1 // pred_check_branch
      %1700 = sbr.rel (0) target = $region57
    $region56: #{tpu_custom_call.1} parent=1 // pred_region
      %s1702 = ssub.s32 256, 256
      %1703 = vsyncadd [#allocation4], %s1702
      %s1704 = sshll.u32 [#allocation13], 4
      %s1705 = int_to_ptr.vmem [resolvable:$true] %s1704
      %1710 = dma.vmem_to_hbm [thread:$0]  %s1705, 256, %s7, [#allocation4], 128, 128, 8
    $region57: #{tpu_custom_call.1} parent=1 // pred_fallthru
      _
    // Predicated region
    $region58: #{tpu_custom_call.1} parent=1 // pred_check
      _
    $region59: #{tpu_custom_call.1} parent=1 // pred_check_branch
      %1712 = sbr.rel (0) target = $region61
    $region60: #{tpu_custom_call.1} parent=1 // pred_region
      %1713 = dma.done [#allocation4], 256
    $region61: #{tpu_custom_call.1} parent=1 // pred_fallthru
      _
    %1714 = vsyncpa [#allocation3], 1
    %1715 = vsyncpa [#allocation6], 1
    %1716 = vsyncpa [#allocation9], 1
    %1717 = vsyncpa [#allocation12], 1
    %1718 = vsyncpa [#allocation4], 1

</llo_original>
